<compile_context>
chip_gen: v7x
topology: tpu7x:2x2x1
jax: 0.10.0
libtpu: 0.0.40
codegen_flags: <defaults>
</compile_context>

<pallas_src>
import functools

import jax
import jax.numpy as jnp
from jax.experimental import pallas as pl
from jax.experimental.pallas import tpu as pltpu


def _window_attn_kernel(x_ref, mask_ref, cmask_ref, wqkv_ref, wproj_ref,
                        bproj_ref, o_ref, *, num_heads, scale):
    # x_ref:     (W, N, C)  f32   W windows of tokens for this grid step
    # mask_ref:  (NW, H*N, H*N) f32  head-block-diagonal additive mask (resident)
    # cmask_ref: (H, 1, C)  f32   per-head channel indicator (resident)
    # wqkv_ref:  (C, 3C)    bf16  fused QKV weight (math layout, x @ W)
    # wproj_ref: (C, C)     bf16
    # bproj_ref: (1, C)     f32
    # o_ref:     (W, N, C)
    w, n, c = x_ref.shape
    nw = mask_ref.shape[0]
    h = num_heads
    hn = h * n
    reps = w // nw

    x2 = x_ref[...].reshape(w * n, c)

    # Fused QKV projection: one (W*N, C) x (C, 3C) bf16 MXU matmul, f32 accumulate.
    qkv = jnp.dot(x2.astype(jnp.bfloat16), wqkv_ref[...],
                  preferred_element_type=jnp.float32)            # (W*N, 3C) f32
    q = qkv[:, 0 * c:1 * c] * scale
    k = qkv[:, 1 * c:2 * c]
    v = qkv[:, 2 * c:3 * c]

    # Head-stack along the token axis with per-head channel masking:
    #   t_st[w, h*N + i, c] = t[w, i, c] * [channel c belongs to head h]
    # Channels stay on the lane axis (no N<->H transposes); the per-head attention
    # becomes a single batched (W, H*N, H*N) score matmul whose off-diagonal head
    # blocks are exactly zero (disjoint channel masks).
    cm = cmask_ref[...]                                          # (H, 1, C)

    def stack(t):
        t4 = t.reshape(w, 1, n, c) * cm                          # (W, H, N, C)
        return t4.reshape(w, hn, c).astype(jnp.bfloat16)

    q_st, k_st, v_st = stack(q), stack(k), stack(v)

    # Scores for all heads / all windows of this step (batched over windows).
    s = jnp.einsum('wqc,wkc->wqk', q_st, k_st,
                   preferred_element_type=jnp.float32)           # (W, HN, HN) f32

    # Additive mask: window mask on diagonal head blocks, -1e9 elsewhere.
    # Blocks cover whole multiples of NW windows, so window j in the block uses
    # mask index j % NW -> a leading-dim broadcast of the resident mask.
    s = (s.reshape(reps, nw, hn, hn) + mask_ref[...][None]).reshape(w, hn, hn)

    # Row softmax in f32 (per-head, because off-diagonal blocks are masked out).
    s = s - jnp.max(s, axis=-1, keepdims=True)
    e = jnp.exp(s)
    p = e * pl.reciprocal(jnp.sum(e, axis=-1, keepdims=True), approx=True)

    # P @ V (batched).  The channel-masked V keeps only the matching head's output
    # channels, so summing the H stacked copies reassembles (W, N, C) directly
    # (no concat, no transpose).
    o_st = jnp.einsum('wqk,wkc->wqc', p.astype(jnp.bfloat16), v_st,
                      preferred_element_type=jnp.float32)        # (W, HN, C)
    attn_out = jnp.sum(o_st.reshape(w, h, n, c), axis=1)         # (W, N, C)

    # Output projection + bias (attn_drop / proj_drop are identity at rate 0.0).
    out = jnp.dot(attn_out.reshape(w * n, c).astype(jnp.bfloat16), wproj_ref[...],
                  preferred_element_type=jnp.float32)            # (W*N, C)
    out = out + bproj_ref[...]
    o_ref[...] = out.reshape(w, n, c).astype(o_ref.dtype)


def _choose_windows_per_block(b_, nw, *, max_windows_per_block=64):
    """Windows per grid step: a multiple of NW that divides B_, as large as the cap
    allows while keeping >= 2 grid steps when possible (v7x has 2 TensorCores)."""
    assert b_ % nw == 0
    imgs = b_ // nw
    divisors = [d for d in range(1, imgs + 1)
                if imgs % d == 0 and d * nw <= max_windows_per_block]
    if not divisors:
        divisors = [1]
    two_step = [d for d in divisors if imgs // d >= 2]
    return nw * max(two_step if two_step else divisors)


def window_attention_4d(x, mask, w_qkv, w_proj, b_proj, *, num_heads):
    """Forward pass of WindowAttention4D (mask path), batched over windows.

    x:      (B_, N, C) f32 window-partitioned tokens, channels last.
    mask:   (NW, N, N) f32 additive shifted-window mask (B_ % NW == 0).
    w_qkv:  (C, 3C), w_proj: (C, C) math layout (x @ W); b_proj: (C,).
    """
    b_, n, c = x.shape
    nw = mask.shape[0]
    assert b_ % nw == 0
    assert c % num_heads == 0
    hd = c // num_heads
    hn = num_heads * n
    scale = hd ** (-0.5)

    wpb = _choose_windows_per_block(b_, nw)
    assert wpb % nw == 0 and b_ % wpb == 0
    grid = (b_ // wpb,)

    # Head-block-diagonal additive mask, built once wrapper-side:
    # window mask on diagonal head blocks, -1e9 on off-diagonal head blocks.
    head_id = jnp.arange(hn, dtype=jnp.int32) // n
    same_head = head_id[:, None] == head_id[None, :]             # (HN, HN)
    big_mask = jnp.where(
        same_head[None],
        jnp.tile(mask.astype(jnp.float32), (1, num_heads, num_heads)),
        jnp.float32(-1e9))                                       # (NW, HN, HN)

    # Per-head channel indicator (H, 1, C): 1 where the channel belongs to head h.
    chan_head = jnp.arange(c, dtype=jnp.int32) // hd
    cmask = (chan_head[None, :] == jnp.arange(num_heads, dtype=jnp.int32)[:, None]
             ).astype(jnp.float32).reshape(num_heads, 1, c)

    # MXU-native bf16 weights (f32 accumulation happens inside the kernel).
    w_qkv_bf16 = w_qkv.astype(jnp.bfloat16)
    w_proj_bf16 = w_proj.astype(jnp.bfloat16)
    b_proj2d = b_proj.reshape(1, c).astype(jnp.float32)

    kernel = functools.partial(_window_attn_kernel, num_heads=num_heads,
                               scale=scale)

    # NOTE(v7x): at production Swin sizes (large C), re-derive wpb against the
    # 64 MiB physical / 32 MiB scoped VMEM and set vmem_limit_bytes explicitly.
    return pl.pallas_call(
        kernel,
        out_shape=jax.ShapeDtypeStruct((b_, n, c), x.dtype),
        grid_spec=pltpu.PrefetchScalarGridSpec(
            num_scalar_prefetch=0,
            grid=grid,
            in_specs=[
                pl.BlockSpec((wpb, n, c), lambda i: (i, 0, 0)),          # x (W windows/step)
                pl.BlockSpec((nw, hn, hn), lambda i: (0, 0, 0)),          # big mask, resident
                pl.BlockSpec((num_heads, 1, c), lambda i: (0, 0, 0)),     # channel mask, resident
                pl.BlockSpec((c, 3 * c), lambda i: (0, 0)),               # W_qkv (bf16), resident
                pl.BlockSpec((c, c), lambda i: (0, 0)),                   # W_proj (bf16), resident
                pl.BlockSpec((1, c), lambda i: (0, 0)),                   # b_proj
            ],
            out_specs=pl.BlockSpec((wpb, n, c), lambda i: (i, 0, 0)),
        ),
        compiler_params=pltpu.CompilerParams(
            dimension_semantics=("parallel",)),   # >= 2 grid steps -> both v7x TCs busy
    )(x, big_mask, cmask, w_qkv_bf16, w_proj_bf16, b_proj2d)


def reference_forward(x, mask, w_qkv, w_proj, b_proj, *, num_heads):
    """Pure-JAX f32 mirror of the PyTorch WindowAttention4D.forward (mask path)."""
    b_, n, c = x.shape
    nw = mask.shape[0]
    hd = c // num_heads
    scale = hd ** (-0.5)

    qkv = x @ w_qkv                                                  # (B_, N, 3C)
    qkv = qkv.reshape(b_, n, 3, num_heads, hd).transpose(2, 0, 3, 1, 4)
    q, k, v = qkv[0], qkv[1], qkv[2]                                 # (B_, H, N, hd)
    q = q * scale
    attn = jnp.einsum('bhqd,bhkd->bhqk', q, k)                       # (B_, H, N, N)
    attn = attn.reshape(b_ // nw, nw, num_heads, n, n) + mask[None, :, None, :, :]
    attn = attn.reshape(b_, num_heads, n, n)
    attn = jax.nn.softmax(attn, axis=-1)
    out = jnp.einsum('bhqk,bhkd->bhqd', attn, v)
    out = out.transpose(0, 2, 1, 3).reshape(b_, n, c)
    return out @ w_proj + b_proj


if __name__ == "__main__":
    # Small, module-consistent shapes:
    #   window_size = (2, 2, 2, 2) -> N = 16 tokens per window
    #   dim (C) = 32, num_heads = 4, head_dim = 8
    #   batch = 2, num_windows per image (NW) = 4 -> B_ = 8
    dim = 32
    num_heads = 4
    n = 16       # 2*2*2*2
    nw = 4
    batch = 2
    b_ = batch * nw

    key = jax.random.PRNGKey(0)
    kx, km, kqkv, kproj, kbias = jax.random.split(key, 5)

    x = jax.random.normal(kx, (b_, n, dim), dtype=jnp.float32)

    # Additive window mask: zeros and -100.0 (typical shifted-window mask values).
    mask_bits = jax.random.bernoulli(km, p=0.25, shape=(nw, n, n))
    mask = jnp.where(mask_bits, -100.0, 0.0).astype(jnp.float32)

    # Deterministic parameter init (qkv_bias=False by default; proj has bias).
    w_qkv = jax.random.normal(kqkv, (dim, 3 * dim), dtype=jnp.float32) * 0.05
    w_proj = jax.random.normal(kproj, (dim, dim), dtype=jnp.float32) * 0.05
    b_proj = jax.random.normal(kbias, (dim,), dtype=jnp.float32) * 0.05

    out = window_attention_4d(x, mask, w_qkv, w_proj, b_proj, num_heads=num_heads)
    out = jax.block_until_ready(out)

    ref = reference_forward(x, mask, w_qkv, w_proj, b_proj, num_heads=num_heads)
    ref = jax.block_until_ready(ref)

    assert out.shape == (b_, n, dim)
    # bf16 MXU operands + approximate reciprocal -> slightly looser tolerance than f32.
    assert jnp.allclose(out, ref, atol=2e-2, rtol=2e-2), (
        f"max abs diff = {jnp.max(jnp.abs(out - ref))}")

    print("KERNEL_OK")
</pallas_src>

<mosaic_0001>
module attributes {stable_mosaic.version = 11 : i64} {
  func.func @_window_attn_kernel(%arg0: i32, %arg1: memref<4x16x32xf32, #tpu.memory_space<vmem>>, %arg2: memref<4x64x64xf32, #tpu.memory_space<vmem>>, %arg3: memref<4x1x32xf32, #tpu.memory_space<vmem>>, %arg4: memref<32x96xbf16, #tpu.memory_space<vmem>>, %arg5: memref<32x32xbf16, #tpu.memory_space<vmem>>, %arg6: memref<1x32xf32, #tpu.memory_space<vmem>>, %arg7: memref<4x16x32xf32, #tpu.memory_space<vmem>>) attributes {dimension_semantics = [#tpu.dimension_semantics<parallel>], iteration_bounds = array<i64: 2>, scalar_prefetch = 0 : i64, scratch_operands = 0 : i64, tpu.core_type = #tpu.core_type<tc>, window_params = [{transform_indices = @transform_0, window_bounds = array<i64: 4, 16, 32>}, {pipeline_mode = #tpu.pipeline_mode<synchronous>, transform_indices = @transform_1, window_bounds = array<i64: 4, 64, 64>}, {pipeline_mode = #tpu.pipeline_mode<synchronous>, transform_indices = @transform_2, window_bounds = array<i64: 4, 1, 32>}, {pipeline_mode = #tpu.pipeline_mode<synchronous>, transform_indices = @transform_3, window_bounds = array<i64: 32, 96>}, {pipeline_mode = #tpu.pipeline_mode<synchronous>, transform_indices = @transform_4, window_bounds = array<i64: 32, 32>}, {pipeline_mode = #tpu.pipeline_mode<synchronous>, transform_indices = @transform_5, window_bounds = array<i64: 1, 32>}, {transform_indices = @transform_6, window_bounds = array<i64: 4, 16, 32>}]} {
    %c0 = arith.constant 0 : index
    %c0_0 = arith.constant 0 : index
    %c0_1 = arith.constant 0 : index
    %0 = vector.load %arg1[%c0, %c0_0, %c0_1] : memref<4x16x32xf32, #tpu.memory_space<vmem>>, vector<4x16x32xf32>
    %1 = vector.shape_cast %0 : vector<4x16x32xf32> to vector<64x32xf32>
    %2 = arith.truncf %1 : vector<64x32xf32> to vector<64x32xbf16>
    %c0_2 = arith.constant 0 : index
    %c0_3 = arith.constant 0 : index
    %3 = vector.load %arg4[%c0_2, %c0_3] : memref<32x96xbf16, #tpu.memory_space<vmem>>, vector<32x96xbf16>
    %cst = arith.constant dense<0.000000e+00> : vector<64x96xf32>
    %4 = tpu.matmul %2, %3, %cst {dimension_numbers = #tpu.dot_dimension_numbers<[1], [0], [0], [1], [0, 0, 1, 1], [], []>} : vector<64x32xbf16>, vector<32x96xbf16>, vector<64x96xf32> -> vector<64x96xf32>
    %5 = vector.extract_strided_slice %4 {offsets = [0, 0], sizes = [64, 32], strides = [1, 1]} : vector<64x96xf32> to vector<64x32xf32>
    %cst_4 = arith.constant 0.353553385 : f32
    %6 = vector.broadcast %cst_4 : f32 to vector<64x32xf32>
    %7 = arith.mulf %5, %6 : vector<64x32xf32>
    %8 = vector.extract_strided_slice %4 {offsets = [0, 32], sizes = [64, 32], strides = [1, 1]} : vector<64x96xf32> to vector<64x32xf32>
    %9 = vector.extract_strided_slice %4 {offsets = [0, 64], sizes = [64, 32], strides = [1, 1]} : vector<64x96xf32> to vector<64x32xf32>
    %c0_5 = arith.constant 0 : index
    %c0_6 = arith.constant 0 : index
    %c0_7 = arith.constant 0 : index
    %10 = vector.load %arg3[%c0_5, %c0_6, %c0_7] : memref<4x1x32xf32, #tpu.memory_space<vmem>>, vector<4x1x32xf32>
    %11 = vector.shape_cast %7 : vector<64x32xf32> to vector<4x1x16x32xf32>
    %12 = vector.shape_cast %10 : vector<4x1x32xf32> to vector<1x4x1x32xf32>
    %13 = vector.broadcast %11 : vector<4x1x16x32xf32> to vector<4x4x16x32xf32>
    %14 = vector.broadcast %12 : vector<1x4x1x32xf32> to vector<4x4x16x32xf32>
    %15 = arith.mulf %13, %14 : vector<4x4x16x32xf32>
    %16 = vector.shape_cast %15 : vector<4x4x16x32xf32> to vector<4x64x32xf32>
    %17 = arith.truncf %16 : vector<4x64x32xf32> to vector<4x64x32xbf16>
    %18 = vector.shape_cast %8 : vector<64x32xf32> to vector<4x1x16x32xf32>
    %19 = vector.shape_cast %10 : vector<4x1x32xf32> to vector<1x4x1x32xf32>
    %20 = vector.broadcast %18 : vector<4x1x16x32xf32> to vector<4x4x16x32xf32>
    %21 = vector.broadcast %19 : vector<1x4x1x32xf32> to vector<4x4x16x32xf32>
    %22 = arith.mulf %20, %21 : vector<4x4x16x32xf32>
    %23 = vector.shape_cast %22 : vector<4x4x16x32xf32> to vector<4x64x32xf32>
    %24 = arith.truncf %23 : vector<4x64x32xf32> to vector<4x64x32xbf16>
    %25 = vector.shape_cast %9 : vector<64x32xf32> to vector<4x1x16x32xf32>
    %26 = vector.shape_cast %10 : vector<4x1x32xf32> to vector<1x4x1x32xf32>
    %27 = vector.broadcast %25 : vector<4x1x16x32xf32> to vector<4x4x16x32xf32>
    %28 = vector.broadcast %26 : vector<1x4x1x32xf32> to vector<4x4x16x32xf32>
    %29 = arith.mulf %27, %28 : vector<4x4x16x32xf32>
    %30 = vector.shape_cast %29 : vector<4x4x16x32xf32> to vector<4x64x32xf32>
    %31 = arith.truncf %30 : vector<4x64x32xf32> to vector<4x64x32xbf16>
    "tpu.trace_start"() <{level = 10 : i32, message = "wqc,wkc->wqk"}> : () -> ()
    %cst_8 = arith.constant dense<0.000000e+00> : vector<4x64x64xf32>
    %32 = tpu.matmul %17, %24, %cst_8 {dimension_numbers = #tpu.dot_dimension_numbers<[2], [2], [1], [1], [0, 0, 0, 1, 1, 1], [0], [0]>} : vector<4x64x32xbf16>, vector<4x64x32xbf16>, vector<4x64x64xf32> -> vector<4x64x64xf32>
    "tpu.trace_stop"() : () -> ()
    %33 = vector.shape_cast %32 : vector<4x64x64xf32> to vector<1x4x64x64xf32>
    %c0_9 = arith.constant 0 : index
    %c0_10 = arith.constant 0 : index
    %c0_11 = arith.constant 0 : index
    %34 = vector.load %arg2[%c0_9, %c0_10, %c0_11] : memref<4x64x64xf32, #tpu.memory_space<vmem>>, vector<4x64x64xf32>
    %35 = vector.shape_cast %34 : vector<4x64x64xf32> to vector<1x4x64x64xf32>
    %36 = arith.addf %33, %35 : vector<1x4x64x64xf32>
    %37 = vector.shape_cast %36 : vector<1x4x64x64xf32> to vector<4x64x64xf32>
    %cst_12 = arith.constant dense<0xFF800000> : vector<4x64xf32>
    %38 = vector.multi_reduction <maximumf>, %37, %cst_12 [2] : vector<4x64x64xf32> to vector<4x64xf32>
    %39 = vector.shape_cast %38 : vector<4x64xf32> to vector<4x64x1xf32>
    %40 = vector.broadcast %39 : vector<4x64x1xf32> to vector<4x64x64xf32>
    %41 = arith.subf %37, %40 : vector<4x64x64xf32>
    %42 = math.exp %41 : vector<4x64x64xf32>
    %cst_13 = arith.constant dense<0.000000e+00> : vector<4x64xf32>
    %43 = vector.multi_reduction <add>, %42, %cst_13 [2] : vector<4x64x64xf32> to vector<4x64xf32>
    %44 = vector.shape_cast %43 : vector<4x64xf32> to vector<4x64x1xf32>
    %45 = tpu.reciprocal %44 {approx = true} : vector<4x64x1xf32> -> vector<4x64x1xf32>
    %46 = vector.broadcast %45 : vector<4x64x1xf32> to vector<4x64x64xf32>
    %47 = arith.mulf %42, %46 : vector<4x64x64xf32>
    %48 = arith.truncf %47 : vector<4x64x64xf32> to vector<4x64x64xbf16>
    "tpu.trace_start"() <{level = 10 : i32, message = "wqk,wkc->wqc"}> : () -> ()
    %cst_14 = arith.constant dense<0.000000e+00> : vector<4x64x32xf32>
    %49 = tpu.matmul %48, %31, %cst_14 {dimension_numbers = #tpu.dot_dimension_numbers<[2], [1], [1], [2], [0, 0, 0, 1, 1, 2], [0], [0]>} : vector<4x64x64xbf16>, vector<4x64x32xbf16>, vector<4x64x32xf32> -> vector<4x64x32xf32>
    "tpu.trace_stop"() : () -> ()
    %50 = vector.shape_cast %49 : vector<4x64x32xf32> to vector<4x4x16x32xf32>
    %cst_15 = arith.constant dense<0.000000e+00> : vector<4x16x32xf32>
    %51 = vector.multi_reduction <add>, %50, %cst_15 [1] : vector<4x4x16x32xf32> to vector<4x16x32xf32>
    %52 = vector.shape_cast %51 : vector<4x16x32xf32> to vector<64x32xf32>
    %53 = arith.truncf %52 : vector<64x32xf32> to vector<64x32xbf16>
    %c0_16 = arith.constant 0 : index
    %c0_17 = arith.constant 0 : index
    %54 = vector.load %arg5[%c0_16, %c0_17] : memref<32x32xbf16, #tpu.memory_space<vmem>>, vector<32x32xbf16>
    %cst_18 = arith.constant dense<0.000000e+00> : vector<64x32xf32>
    %55 = tpu.matmul %53, %54, %cst_18 {dimension_numbers = #tpu.dot_dimension_numbers<[1], [0], [0], [1], [0, 0, 1, 1], [], []>} : vector<64x32xbf16>, vector<32x32xbf16>, vector<64x32xf32> -> vector<64x32xf32>
    %c0_19 = arith.constant 0 : index
    %c0_20 = arith.constant 0 : index
    %56 = vector.load %arg6[%c0_19, %c0_20] : memref<1x32xf32, #tpu.memory_space<vmem>>, vector<1x32xf32>
    %57 = vector.broadcast %56 : vector<1x32xf32> to vector<64x32xf32>
    %58 = arith.addf %55, %57 : vector<64x32xf32>
    %59 = vector.shape_cast %58 : vector<64x32xf32> to vector<4x16x32xf32>
    %c0_21 = arith.constant 0 : index
    %c0_22 = arith.constant 0 : index
    %c0_23 = arith.constant 0 : index
    %60 = vector.load %arg7[%c0_21, %c0_22, %c0_23] : memref<4x16x32xf32, #tpu.memory_space<vmem>>, vector<4x16x32xf32>
    tpu.vector_store %arg7[%c0_21, %c0_22, %c0_23], %59 {strides = array<i32>} : memref<4x16x32xf32, #tpu.memory_space<vmem>>, vector<4x16x32xf32>,
    return
  }
  func.func @transform_0(%arg0: i32) -> (i32, i32, i32) {
    %c0_i32 = arith.constant 0 : i32
    %c0_i32_0 = arith.constant 0 : i32
    %c0_i32_1 = arith.constant 0 : i32
    return %arg0, %c0_i32, %c0_i32_0 : i32, i32, i32
  }
  func.func @transform_1(%arg0: i32) -> (i32, i32, i32) {
    %c0_i32 = arith.constant 0 : i32
    %c0_i32_0 = arith.constant 0 : i32
    %c0_i32_1 = arith.constant 0 : i32
    %c0_i32_2 = arith.constant 0 : i32
    return %c0_i32, %c0_i32_0, %c0_i32_1 : i32, i32, i32
  }
  func.func @transform_2(%arg0: i32) -> (i32, i32, i32) {
    %c0_i32 = arith.constant 0 : i32
    %c0_i32_0 = arith.constant 0 : i32
    %c0_i32_1 = arith.constant 0 : i32
    %c0_i32_2 = arith.constant 0 : i32
    return %c0_i32, %c0_i32_0, %c0_i32_1 : i32, i32, i32
  }
  func.func @transform_3(%arg0: i32) -> (i32, i32) {
    %c0_i32 = arith.constant 0 : i32
    %c0_i32_0 = arith.constant 0 : i32
    %c0_i32_1 = arith.constant 0 : i32
    return %c0_i32, %c0_i32_0 : i32, i32
  }
  func.func @transform_4(%arg0: i32) -> (i32, i32) {
    %c0_i32 = arith.constant 0 : i32
    %c0_i32_0 = arith.constant 0 : i32
    %c0_i32_1 = arith.constant 0 : i32
    return %c0_i32, %c0_i32_0 : i32, i32
  }
  func.func @transform_5(%arg0: i32) -> (i32, i32) {
    %c0_i32 = arith.constant 0 : i32
    %c0_i32_0 = arith.constant 0 : i32
    %c0_i32_1 = arith.constant 0 : i32
    return %c0_i32, %c0_i32_0 : i32, i32
  }
  func.func @transform_6(%arg0: i32) -> (i32, i32, i32) {
    %c0_i32 = arith.constant 0 : i32
    %c0_i32_0 = arith.constant 0 : i32
    %c0_i32_1 = arith.constant 0 : i32
    return %arg0, %c0_i32, %c0_i32_0 : i32, i32, i32
  }
}

</mosaic_0001>

<llo_original>
// kernel: tpu_custom_call.1
$region0: #{tpu_custom_call.1}
  #allocation0 [shape = 'u32[]', space=smem, size = 0x4, offset = 0x4, fixed_abs, tag = 'smem constant byte address 0x4 - core index']
  #allocation1 [shape = 'u32[144,128]{1,0:T(1,128)}', space=vmem, size = 0x12000, scoped, tag = 'internal scratch']
  %s0 = inlined_call_operand.hbm [shape: f32[8,16,32], index: 0, kind: input, shape index: {}]
  %s1 = inlined_call_operand.hbm [shape: f32[4,64,64], index: 1, kind: input, shape index: {}]
  %s2 = inlined_call_operand.vmem [shape: f32[4,1,32], index: 2, kind: input, shape index: {}]
  %s3 = inlined_call_operand.hbm [shape: bf16[32,96], index: 3, kind: input, shape index: {}]
  %s4 = inlined_call_operand.hbm [shape: bf16[32,32], index: 4, kind: input, shape index: {}]
  %s5 = inlined_call_operand.vmem [shape: f32[1,32], index: 5, kind: input, shape index: {}]
  %s6 = inlined_call_operand.hbm [shape: f32[8,16,32], index: 6, kind: output, shape index: {}]
  %s7 = sld [smem:[#allocation0]]
  $region73: #{tpu_custom_call.1} parent=0
    _
  %s9 = ssub.s32 1, %s7
  %s10 = scalar_select 0, %s9, %s7
  $region1: #{tpu_custom_call.1} parent=0
    #allocation2 [shape = 'u8[65536]{0}', space=vmem, size = 0x10000, scoped, tag = 'input window, operand 0']
    #allocation3 [shape = 's32[2]{0}', space=sflag, size = 0x8, scoped, tag = 'scoped memory for tpu_custom_call.1']
    #allocation4 [shape = 's32[2]{0}', space=sflag, size = 0x8, scoped, tag = 'scoped memory for tpu_custom_call.1']
    #allocation5 [shape = 'u8[131072]{0}', space=vmem, size = 0x20000, scoped, tag = 'input window, operand 1, single buffered']
    #allocation6 [shape = 's32[1]{0}', space=sflag, size = 0x4, scoped, tag = 'scoped memory for tpu_custom_call.1']
    #allocation7 [shape = 'u8[8192]{0}', space=vmem, size = 0x2000, scoped, tag = 'input window, operand 3, single buffered']
    #allocation8 [shape = 'u8[8192]{0}', space=vmem, size = 0x2000, scoped, tag = 'input window, operand 4, single buffered']
    #allocation9 [shape = 's32[1]{0}', space=sflag, size = 0x4, scoped, tag = 'scoped memory for tpu_custom_call.1']
    #allocation10 [shape = 'u8[65536]{0}', space=vmem, size = 0x10000, scoped, tag = 'output window, operand 0']
    %11 = vsyncpa [#allocation3], 0
    %s12 = scalar_lea.sflag [#allocation3], 1
    %13 = vsyncpa %s12, 0
    %14 = vsyncpa [#allocation6], 0
    %15 = vsyncpa [#allocation9], 0
    %16 = vsyncpa [#allocation4], 0
    %s17 = scalar_lea.sflag [#allocation4], 1
    %18 = vsyncpa %s17, 0
    loop: start=0, step=1, limit=4
    $region2: #{tpu_custom_call.1} parent=1 // loop_pre_header
      _
    $region3: #{tpu_custom_call.1} parent=1 // loop_header
      %s20 = sphi 0, %s24
      %p21 = scmp.ge.s32.totalorder %s20, 4
      %s30 = sphi 0, %s32
      %s33 = sphi 0, %s30
      %s34 = sphi 0, %s33
      %s50 = sphi 0, %s34
      %s54 = sphi 0, %s54
      %s56 = sphi 0, %s54
      %s57 = sphi 0, %s56
      %s71 = sphi 0, %s57
      %s75 = sphi 0, %s75
      %s77 = sphi 0, %s75
      %s78 = sphi 0, %s77
      %s92 = sphi 0, %s78
      %s96 = sphi 0, %s96
      %s98 = sphi 0, %s96
      %s99 = sphi 0, %s98
      %s113 = sphi 0, %s99
      %s117 = sphi 0, %s117
      %s119 = sphi 0, %s117
      %s120 = sphi 0, %s119
      %s134 = sphi 0, %s120
      %s138 = sphi 0, %s138
      %s140 = sphi 0, %s138
      %s141 = sphi 0, %s140
      %s155 = sphi 0, %s141
      %s161 = sphi 0, %s163
      %s164 = sphi 0, %s161
      %s165 = sphi 0, %s164
      %s181 = sphi 0, %s165
    $region4: #{tpu_custom_call.1} parent=1 // loop_header_branch
      %23 = sbr.rel (%p21) target = $region8
    $region5: #{tpu_custom_call.1} parent=1 // loop_body
      %s25 = ssub.s32 %s20, 1
      %s26 = ssub.s32 %s20, 2
      %s27 = sadd.s32 %s20, 1
      %s28 = ssub.s32 %s20, %s27
      %p29 = scmp.eq.s32.totalorder %s28, 0
      %s31 = sadd.s32 %s30, 1
      %s32 = scalar_select %p29, %s30, %s31
      %p35 = pneg %p29
      %p36 = scmp.eq.s32.totalorder %s20, 1
      %p37 = por %p35, %p36
      %p38 = scmp.ne.s32.totalorder %s30, %s33
      %p39 = scmp.eq.s32.totalorder %s20, 0
      %p40 = por %p38, %p39
      %p41 = scmp.ne.s32.totalorder %s30, %s33
      %p42 = scmp.eq.s32.totalorder %s25, 1
      %p43 = por %p41, %p42
      %p44 = scmp.ne.s32.totalorder %s33, %s34
      %p45 = scmp.eq.s32.totalorder %s25, 0
      %p46 = por %p44, %p45
      %p47 = scmp.ne.s32.totalorder %s33, %s34
      %p48 = scmp.eq.s32.totalorder %s26, 1
      %p49 = por %p47, %p48
      %p51 = scmp.ne.s32.totalorder %s34, %s50
      %p52 = scmp.eq.s32.totalorder %s26, 0
      %p53 = por %p51, %p52
      %s55 = sadd.s32 %s54, 1
      %p58 = scmp.eq.s32.totalorder %s20, 1
      %p59 = scmp.ne.s32.totalorder %s54, %s56
      %p60 = scmp.eq.s32.totalorder %s20, 0
      %p61 = por %p59, %p60
      %p62 = scmp.ne.s32.totalorder %s54, %s56
      %p63 = scmp.eq.s32.totalorder %s25, 1
      %p64 = por %p62, %p63
      %p65 = scmp.ne.s32.totalorder %s56, %s57
      %p66 = scmp.eq.s32.totalorder %s25, 0
      %p67 = por %p65, %p66
      %p68 = scmp.ne.s32.totalorder %s56, %s57
      %p69 = scmp.eq.s32.totalorder %s26, 1
      %p70 = por %p68, %p69
      %p72 = scmp.ne.s32.totalorder %s57, %s71
      %p73 = scmp.eq.s32.totalorder %s26, 0
      %p74 = por %p72, %p73
      %s76 = sadd.s32 %s75, 1
      %p79 = scmp.eq.s32.totalorder %s20, 1
      %p80 = scmp.ne.s32.totalorder %s75, %s77
      %p81 = scmp.eq.s32.totalorder %s20, 0
      %p82 = por %p80, %p81
      %p83 = scmp.ne.s32.totalorder %s75, %s77
      %p84 = scmp.eq.s32.totalorder %s25, 1
      %p85 = por %p83, %p84
      %p86 = scmp.ne.s32.totalorder %s77, %s78
      %p87 = scmp.eq.s32.totalorder %s25, 0
      %p88 = por %p86, %p87
      %p89 = scmp.ne.s32.totalorder %s77, %s78
      %p90 = scmp.eq.s32.totalorder %s26, 1
      %p91 = por %p89, %p90
      %p93 = scmp.ne.s32.totalorder %s78, %s92
      %p94 = scmp.eq.s32.totalorder %s26, 0
      %p95 = por %p93, %p94
      %s97 = sadd.s32 %s96, 1
      %p100 = scmp.eq.s32.totalorder %s20, 1
      %p101 = scmp.ne.s32.totalorder %s96, %s98
      %p102 = scmp.eq.s32.totalorder %s20, 0
      %p103 = por %p101, %p102
      %p104 = scmp.ne.s32.totalorder %s96, %s98
      %p105 = scmp.eq.s32.totalorder %s25, 1
      %p106 = por %p104, %p105
      %p107 = scmp.ne.s32.totalorder %s98, %s99
      %p108 = scmp.eq.s32.totalorder %s25, 0
      %p109 = por %p107, %p108
      %p110 = scmp.ne.s32.totalorder %s98, %s99
      %p111 = scmp.eq.s32.totalorder %s26, 1
      %p112 = por %p110, %p111
      %p114 = scmp.ne.s32.totalorder %s99, %s113
      %p115 = scmp.eq.s32.totalorder %s26, 0
      %p116 = por %p114, %p115
      %s118 = sadd.s32 %s117, 1
      %p121 = scmp.eq.s32.totalorder %s20, 1
      %p122 = scmp.ne.s32.totalorder %s117, %s119
      %p123 = scmp.eq.s32.totalorder %s20, 0
      %p124 = por %p122, %p123
      %p125 = scmp.ne.s32.totalorder %s117, %s119
      %p126 = scmp.eq.s32.totalorder %s25, 1
      %p127 = por %p125, %p126
      %p128 = scmp.ne.s32.totalorder %s119, %s120
      %p129 = scmp.eq.s32.totalorder %s25, 0
      %p130 = por %p128, %p129
      %p131 = scmp.ne.s32.totalorder %s119, %s120
      %p132 = scmp.eq.s32.totalorder %s26, 1
      %p133 = por %p131, %p132
      %p135 = scmp.ne.s32.totalorder %s120, %s134
      %p136 = scmp.eq.s32.totalorder %s26, 0
      %p137 = por %p135, %p136
      %s139 = sadd.s32 %s138, 1
      %p142 = scmp.eq.s32.totalorder %s20, 1
      %p143 = scmp.ne.s32.totalorder %s138, %s140
      %p144 = scmp.eq.s32.totalorder %s20, 0
      %p145 = por %p143, %p144
      %p146 = scmp.ne.s32.totalorder %s138, %s140
      %p147 = scmp.eq.s32.totalorder %s25, 1
      %p148 = por %p146, %p147
      %p149 = scmp.ne.s32.totalorder %s140, %s141
      %p150 = scmp.eq.s32.totalorder %s25, 0
      %p151 = por %p149, %p150
      %p152 = scmp.ne.s32.totalorder %s140, %s141
      %p153 = scmp.eq.s32.totalorder %s26, 1
      %p154 = por %p152, %p153
      %p156 = scmp.ne.s32.totalorder %s141, %s155
      %p157 = scmp.eq.s32.totalorder %s26, 0
      %p158 = por %p156, %p157
      %s159 = ssub.s32 %s20, %s27
      %p160 = scmp.eq.s32.totalorder %s159, 0
      %s162 = sadd.s32 %s161, 1
      %s163 = scalar_select %p160, %s161, %s162
      %p166 = pneg %p160
      %p167 = scmp.eq.s32.totalorder %s20, 1
      %p168 = por %p166, %p167
      %p169 = scmp.ne.s32.totalorder %s161, %s164
      %p170 = scmp.eq.s32.totalorder %s20, 0
      %p171 = por %p169, %p170
      %p172 = scmp.ne.s32.totalorder %s161, %s164
      %p173 = scmp.eq.s32.totalorder %s25, 1
      %p174 = por %p172, %p173
      %p175 = scmp.ne.s32.totalorder %s164, %s165
      %p176 = scmp.eq.s32.totalorder %s25, 0
      %p177 = por %p175, %p176
      %p178 = scmp.ne.s32.totalorder %s164, %s165
      %p179 = scmp.eq.s32.totalorder %s26, 1
      %p180 = por %p178, %p179
      %p182 = scmp.ne.s32.totalorder %s165, %s181
      %p183 = scmp.eq.s32.totalorder %s26, 0
      %p184 = por %p182, %p183
      %p185 = scmp.le.s32.totalorder 1, %s20
      %p186 = scmp.lt.s32.totalorder %s20, 3
      %p187 = pnand %p185, %p186
      %p188 = pneg %p187
      // Predicated region
      $region9: #{tpu_custom_call.1} parent=5 // pred_check
        _
      $region10: #{tpu_custom_call.1} parent=5 // pred_check_branch
        %190 = sbr.rel (%p187) target = $region12
      $region11: #{tpu_custom_call.1} parent=5 // pred_region
        %s191 = ssub.s32 %s20, 1
        // Predicated region
        $region13: #{tpu_custom_call.1} parent=11 // pred_check
          %p192 = pneg %p67
        $region14: #{tpu_custom_call.1} parent=11 // pred_check_branch
          %194 = sbr.rel (%p192) target = $region16
        $region15: #{tpu_custom_call.1} parent=11 // pred_region
          %s196 = ssub.s32 4096, 4096
          %197 = vsyncadd [#allocation6], %s196
          %s198 = sshll.u32 [#allocation5], 4
          %s199 = int_to_ptr.vmem [resolvable:$true] %s198
          %204 = dma.hbm_to_vmem [thread:$0]  %s1, 4096, %s199, [#allocation6], 128, 128, 8
        $region16: #{tpu_custom_call.1} parent=11 // pred_fallthru
          _
        // Predicated region
        $region17: #{tpu_custom_call.1} parent=11 // pred_check
          %p205 = pneg %p88
        $region18: #{tpu_custom_call.1} parent=11 // pred_check_branch
          %207 = sbr.rel (%p205) target = $region20
        $region19: #{tpu_custom_call.1} parent=11 // pred_region
          _
        $region20: #{tpu_custom_call.1} parent=11 // pred_fallthru
          _
        // Predicated region
        $region21: #{tpu_custom_call.1} parent=11 // pred_check
          %p208 = pneg %p109
        $region22: #{tpu_custom_call.1} parent=11 // pred_check_branch
          %210 = sbr.rel (%p208) target = $region24
        $region23: #{tpu_custom_call.1} parent=11 // pred_region
          %s212 = ssub.s32 256, 256
          %213 = vsyncadd [#allocation6], %s212
          %s214 = sshll.u32 [#allocation7], 4
          %s215 = int_to_ptr.vmem [resolvable:$true] %s214
          %220 = dma.hbm_to_vmem [thread:$0]  %s3, 256, %s215, [#allocation6], 64, 64, 4
        $region24: #{tpu_custom_call.1} parent=11 // pred_fallthru
          _
        // Predicated region
        $region25: #{tpu_custom_call.1} parent=11 // pred_check
          %p221 = pneg %p130
        $region26: #{tpu_custom_call.1} parent=11 // pred_check_branch
          %223 = sbr.rel (%p221) target = $region28
        $region27: #{tpu_custom_call.1} parent=11 // pred_region
          %s225 = ssub.s32 256, 256
          %226 = vsyncadd [#allocation9], %s225
          %s227 = sshll.u32 [#allocation8], 4
          %s228 = int_to_ptr.vmem [resolvable:$true] %s227
          %233 = dma.hbm_to_vmem [thread:$0]  %s4, 256, %s228, [#allocation9], 64, 64, 4
        $region28: #{tpu_custom_call.1} parent=11 // pred_fallthru
          _
        // Predicated region
        $region29: #{tpu_custom_call.1} parent=11 // pred_check
          %p234 = pneg %p151
        $region30: #{tpu_custom_call.1} parent=11 // pred_check_branch
          %236 = sbr.rel (%p234) target = $region32
        $region31: #{tpu_custom_call.1} parent=11 // pred_region
          _
        $region32: #{tpu_custom_call.1} parent=11 // pred_fallthru
          _
      $region12: #{tpu_custom_call.1} parent=5 // pred_fallthru
        _
      %p237 = scmp.lt.s32.totalorder %s20, 2
      // Predicated region
      $region33: #{tpu_custom_call.1} parent=5 // pred_check
        %p238 = pneg %p237
      $region34: #{tpu_custom_call.1} parent=5 // pred_check_branch
        %240 = sbr.rel (%p238) target = $region36
      $region35: #{tpu_custom_call.1} parent=5 // pred_region
        // Predicated region
        $region37: #{tpu_custom_call.1} parent=35 // pred_check
          %p241 = pneg %p40
        $region38: #{tpu_custom_call.1} parent=35 // pred_check_branch
          %243 = sbr.rel (%p241) target = $region40
        $region39: #{tpu_custom_call.1} parent=35 // pred_region
          %s244 = sand.u32 %s30, 1
          %s245 = scalar_lea.sflag [#allocation3], %s244
          %s246 = sand.u32 %s30, 1
          %s247 = smul.addr %s246, 64
          %s248 = scalar_lea.vmem [#allocation2], %s247
          %s249 = smul.u32 4, %s20
          %s251 = ssub.s32 1024, 1024
          %252 = vsyncadd %s245, %s251
          %s253 = smul.addr %s249, 2
          %s254 = smul.addr %s253, 128
          %s255 = scalar_lea.hbm %s0, %s254
          %s256 = sshll.u32 %s248, 4
          %s257 = int_to_ptr.vmem [resolvable:$true] %s256
          %262 = dma.hbm_to_vmem [thread:$0]  %s255, 1024, %s257, %s245, 128, 128, 8
        $region40: #{tpu_custom_call.1} parent=35 // pred_fallthru
          _
      $region36: #{tpu_custom_call.1} parent=5 // pred_fallthru
        _
      %p263 = scmp.le.s32.totalorder 1, %s20
      %p264 = scmp.lt.s32.totalorder %s20, 3
      %p265 = pnand %p263, %p264
      %p266 = pneg %p265
      // Predicated region
      $region41: #{tpu_custom_call.1} parent=5 // pred_check
        _
      $region42: #{tpu_custom_call.1} parent=5 // pred_check_branch
        %268 = sbr.rel (%p265) target = $region44
      $region43: #{tpu_custom_call.1} parent=5 // pred_region
        %s269 = ssub.s32 %s20, 1
        %s270 = sand.u32 %s33, 1
        %s271 = scalar_lea.sflag [#allocation3], %s270
        %s272 = sand.u32 %s33, 1
        %s273 = smul.addr %s272, 64
        %s274 = scalar_lea.vmem [#allocation2], %s273
        // Predicated region
        $region45: #{tpu_custom_call.1} parent=43 // pred_check
          %p275 = pneg %p46
        $region46: #{tpu_custom_call.1} parent=43 // pred_check_branch
          %277 = sbr.rel (%p275) target = $region48
        $region47: #{tpu_custom_call.1} parent=43 // pred_region
          %278 = dma.done %s271, 1024
        $region48: #{tpu_custom_call.1} parent=43 // pred_fallthru
          _
        // Predicated region
        $region49: #{tpu_custom_call.1} parent=43 // pred_check
          %p279 = pneg %p67
        $region50: #{tpu_custom_call.1} parent=43 // pred_check_branch
          %281 = sbr.rel (%p279) target = $region52
        $region51: #{tpu_custom_call.1} parent=43 // pred_region
          %282 = dma.done [#allocation6], 4096
        $region52: #{tpu_custom_call.1} parent=43 // pred_fallthru
          _
        // Predicated region
        $region53: #{tpu_custom_call.1} parent=43 // pred_check
          %p283 = pneg %p109
        $region54: #{tpu_custom_call.1} parent=43 // pred_check_branch
          %285 = sbr.rel (%p283) target = $region56
        $region55: #{tpu_custom_call.1} parent=43 // pred_region
          %286 = dma.done [#allocation6], 256
        $region56: #{tpu_custom_call.1} parent=43 // pred_fallthru
          _
        // Predicated region
        $region57: #{tpu_custom_call.1} parent=43 // pred_check
          %p287 = pneg %p130
        $region58: #{tpu_custom_call.1} parent=43 // pred_check_branch
          %289 = sbr.rel (%p287) target = $region60
        $region59: #{tpu_custom_call.1} parent=43 // pred_region
          %290 = dma.done [#allocation9], 256
        $region60: #{tpu_custom_call.1} parent=43 // pred_fallthru
          _
        %s291 = sand.u32 %s33, 1
        %s292 = scalar_lea.sflag [#allocation3], %s291
        %s293 = sand.u32 %s33, 1
        %s294 = smul.addr %s293, 64
        %s295 = scalar_lea.vmem [#allocation2], %s294
        %p296 = pneg %p46
        %p297 = pneg %p43
        %p298 = pneg %p67
        %p299 = pneg %p64
        %p300 = pneg %p88
        %p301 = pneg %p85
        %p302 = pneg %p109
        %p303 = pneg %p106
        %p304 = pneg %p130
        %p305 = pneg %p127
        %p306 = pneg %p151
        %p307 = pneg %p148
        %p308 = pneg %p177
        %p309 = pneg %p174
        %s310 = sand.u32 %s164, 1
        %s311 = scalar_lea.sflag [#allocation4], %s310
        %s312 = sand.u32 %s164, 1
        %s313 = smul.addr %s312, 64
        %s314 = scalar_lea.vmem [#allocation10], %s313
        %s315 = smul.u32 4, %s25
        %s316 = smul.u32 4, %s25
        %v318 = vld [vmem:[%s274] sm:$0xff]
        %v319 = vld [vmem:[%s274 + $0x8] sm:$0xff]
        %v320 = vld [vmem:[%s274 + $0x10] sm:$0xff]
        %v321 = vld [vmem:[%s274 + $0x18] sm:$0xff]
        %v322 = vld [vmem:[%s274 + $0x20] sm:$0xff]
        %v323 = vld [vmem:[%s274 + $0x28] sm:$0xff]
        %v324 = vld [vmem:[%s274 + $0x30] sm:$0xff]
        %v325 = vld [vmem:[%s274 + $0x38] sm:$0xff]
        %v326 = vpack.c.bf16 %v319, %v318
        %v327 = vpack.c.bf16 %v321, %v320
        %v328 = vpack.c.bf16 %v323, %v322
        %v329 = vpack.c.bf16 %v325, %v324
        %v330 = vld [vmem:[#allocation7] sm:$0xf]
        %v331 = vld [vmem:[#allocation7 + $0x4] sm:$0xf]
        %v332 = vld [vmem:[#allocation7 + $0x8] sm:$0xf]
        %v333 = vld [vmem:[#allocation7 + $0xc] sm:$0xf]
        %v338 = vunpack.c.l.b16 %v330
        %v339 = vunpack.c.l.b16 %v331
        %v340 = vunpack.c.l.b16 %v332
        %v341 = vunpack.c.l.b16 %v333
        %v342 = vpack.c.b16 %v339, %v338
        %v343 = vpack.c.b16 %v341, %v340
        %vm346 = vcmask 261120
        %v348 = vsel %vm346, %v326, 0
        %v351 = vsel %vm346, %v327, 0
        %v354 = vsel %vm346, %v328, 0
        %v357 = vsel %vm346, %v329, 0
        %359 = vmatprep.subr.bf16.mxu0 0
        %360 = vmatpush1.bf16.msra.mxu0 %v342
        %361 = vmatprep.subr.bf16.mxu0 0
        %362 = vmatpush1.bf16.msra.mxu0 %v343
        %363 = vmatprep.subr.bf16.mxu0 0
        %364 = vmatpush1.bf16.msra.mxu0 0
        %365 = vmatprep.subr.bf16.mxu0 0
        %366 = vmatpush1.bf16.msra.mxu0 0
        %367 = vmatprep.subr.bf16.mxu0 0
        %368 = vmatpush1.bf16.msra.mxu0 0
        %369 = vmatprep.subr.bf16.mxu0 0
        %370 = vmatpush1.bf16.msra.mxu0 0
        %371 = vmatprep.subr.bf16.mxu0 0
        %372 = vmatpush1.bf16.msra.mxu0 0
        %373 = vmatprep.subr.bf16.mxu0 0
        %374 = vmatpush1.bf16.msra.mxu0 0
        %375 = vmatprep.subr.bf16.mxu0 0
        %376 = vmatpush1.bf16.msra.mxu0 0
        %377 = vmatprep.subr.bf16.mxu0 0
        %378 = vmatpush1.bf16.msra.mxu0 0
        %379 = vmatprep.subr.bf16.mxu0 0
        %380 = vmatpush1.bf16.msra.mxu0 0
        %381 = vmatprep.subr.bf16.mxu0 0
        %382 = vmatpush1.bf16.msra.mxu0 0
        %383 = vmatprep.subr.bf16.mxu0 0
        %384 = vmatpush1.bf16.msra.mxu0 0
        %385 = vmatprep.subr.bf16.mxu0 0
        %386 = vmatpush1.bf16.msra.mxu0 0
        %387 = vmatprep.subr.bf16.mxu0 0
        %388 = vmatpush1.bf16.msra.mxu0 0
        %389 = vmatprep.subr.bf16.mxu0 0
        %390 = vmatpush1.bf16.msra.mxu0 0
        %391 = vmatprep.mubr.bf16.mxu0 0
        %392 = vmatmul.mubr.bf16.gmra.mrb[0].mxu0 %v348
        %v393 = vpop.f32.mrb[0].mxu0
        %v394 = vadd.f32 0.0, %v393
        %v395 = vpop.f32.mrb[0].mxu0
        %v396 = vpop.f32.mrb[0].mxu0
        %v397 = vadd.f32 0.0, %v396
        %v398 = vpop.f32.mrb[0].mxu0
        %399 = vmatprep.mubr.bf16.mxu0 0
        %400 = vmatmul.mubr.bf16.gmra.mrb[0].mxu0 %v351
        %v401 = vpop.f32.mrb[0].mxu0
        %v402 = vadd.f32 0.0, %v401
        %v403 = vpop.f32.mrb[0].mxu0
        %v404 = vpop.f32.mrb[0].mxu0
        %v405 = vadd.f32 0.0, %v404
        %v406 = vpop.f32.mrb[0].mxu0
        %407 = vmatprep.mubr.bf16.mxu0 0
        %408 = vmatmul.mubr.bf16.gmra.mrb[0].mxu0 %v354
        %v409 = vpop.f32.mrb[0].mxu0
        %v410 = vadd.f32 0.0, %v409
        %v411 = vpop.f32.mrb[0].mxu0
        %v412 = vpop.f32.mrb[0].mxu0
        %v413 = vadd.f32 0.0, %v412
        %v414 = vpop.f32.mrb[0].mxu0
        %415 = vmatprep.mubr.bf16.mxu0 0
        %416 = vmatmul.mubr.bf16.gmra.mrb[0].mxu0 %v357
        %v417 = vpop.f32.mrb[0].mxu0
        %v418 = vadd.f32 0.0, %v417
        %v419 = vpop.f32.mrb[0].mxu0
        %v420 = vpop.f32.mrb[0].mxu0
        %v421 = vadd.f32 0.0, %v420
        %v422 = vpop.f32.mrb[0].mxu0
        %423 = vdwg.mxu0
        %v424 = vmul.f32 %v394, 0.35355338
        %v425 = vmul.f32 %v397, 0.35355338
        %v426 = vmul.f32 %v402, 0.35355338
        %v427 = vmul.f32 %v405, 0.35355338
        %v428 = vmul.f32 %v410, 0.35355338
        %v429 = vmul.f32 %v413, 0.35355338
        %v430 = vmul.f32 %v418, 0.35355338
        %v431 = vmul.f32 %v421, 0.35355338
        %v432 = vld [vmem:[%s2] sm:$0x1]
        %v433 = vld [vmem:[%s2 + $0x1] sm:$0x1]
        %v434 = vld [vmem:[%s2 + $0x2] sm:$0x1]
        %v435 = vld [vmem:[%s2 + $0x3] sm:$0x1]
        %v440 = vlaneseq
        %v441 = vshrl.u32 %v440, 7
        %v442 = vsub.s32 0, %v441
        %v443 = vrot.slane %v432, %v442
        %v444 = vlaneseq
        %v445 = vshrl.u32 %v444, 7
        %v446 = vsub.s32 0, %v445
        %v447 = vrot.slane %v433, %v446
        %v448 = vlaneseq
        %v449 = vshrl.u32 %v448, 7
        %v450 = vsub.s32 0, %v449
        %v451 = vrot.slane %v434, %v450
        %v452 = vlaneseq
        %v453 = vshrl.u32 %v452, 7
        %v454 = vsub.s32 0, %v453
        %v455 = vrot.slane %v435, %v454
        %v460 = vmul.f32 %v424, %v443
        %v461 = vmul.f32 %v425, %v443
        %v462 = vmul.f32 %v424, %v447
        %v463 = vmul.f32 %v425, %v447
        %v464 = vmul.f32 %v424, %v451
        %v465 = vmul.f32 %v425, %v451
        %v466 = vmul.f32 %v424, %v455
        %v467 = vmul.f32 %v425, %v455
        %v468 = vmul.f32 %v426, %v443
        %v469 = vmul.f32 %v427, %v443
        %v470 = vmul.f32 %v426, %v447
        %v471 = vmul.f32 %v427, %v447
        %v472 = vmul.f32 %v426, %v451
        %v473 = vmul.f32 %v427, %v451
        %v474 = vmul.f32 %v426, %v455
        %v475 = vmul.f32 %v427, %v455
        %v476 = vmul.f32 %v428, %v443
        %v477 = vmul.f32 %v429, %v443
        %v478 = vmul.f32 %v428, %v447
        %v479 = vmul.f32 %v429, %v447
        %v480 = vmul.f32 %v428, %v451
        %v481 = vmul.f32 %v429, %v451
        %v482 = vmul.f32 %v428, %v455
        %v483 = vmul.f32 %v429, %v455
        %v484 = vmul.f32 %v430, %v443
        %v485 = vmul.f32 %v431, %v443
        %v486 = vmul.f32 %v430, %v447
        %v487 = vmul.f32 %v431, %v447
        %v488 = vmul.f32 %v430, %v451
        %v489 = vmul.f32 %v431, %v451
        %v490 = vmul.f32 %v430, %v455
        %v491 = vmul.f32 %v431, %v455
        %v492 = vpack.c.bf16 %v461, %v460
        %v493 = vpack.c.bf16 %v463, %v462
        %v494 = vpack.c.bf16 %v465, %v464
        %v495 = vpack.c.bf16 %v467, %v466
        %v496 = vpack.c.bf16 %v469, %v468
        %v497 = vpack.c.bf16 %v471, %v470
        %v498 = vpack.c.bf16 %v473, %v472
        %v499 = vpack.c.bf16 %v475, %v474
        %v500 = vpack.c.bf16 %v477, %v476
        %v501 = vpack.c.bf16 %v479, %v478
        %v502 = vpack.c.bf16 %v481, %v480
        %v503 = vpack.c.bf16 %v483, %v482
        %v504 = vpack.c.bf16 %v485, %v484
        %v505 = vpack.c.bf16 %v487, %v486
        %v506 = vpack.c.bf16 %v489, %v488
        %v507 = vpack.c.bf16 %v491, %v490
        %508 = vrot.lane.b32.xlu0 %v443, 32
        %v509 = vpop.permute.xlu0 %508
        %510 = vrot.lane.b32.xlu0 %v447, 32
        %v511 = vpop.permute.xlu0 %510
        %512 = vrot.lane.b32.xlu0 %v451, 32
        %v513 = vpop.permute.xlu0 %512
        %514 = vrot.lane.b32.xlu0 %v455, 32
        %v515 = vpop.permute.xlu0 %514
        %v520 = vmul.f32 %v394, %v509
        %v521 = vmul.f32 %v397, %v509
        %v522 = vmul.f32 %v394, %v511
        %v523 = vmul.f32 %v397, %v511
        %v524 = vmul.f32 %v394, %v513
        %v525 = vmul.f32 %v397, %v513
        %v526 = vmul.f32 %v394, %v515
        %v527 = vmul.f32 %v397, %v515
        %v528 = vmul.f32 %v402, %v509
        %v529 = vmul.f32 %v405, %v509
        %v530 = vmul.f32 %v402, %v511
        %v531 = vmul.f32 %v405, %v511
        %v532 = vmul.f32 %v402, %v513
        %v533 = vmul.f32 %v405, %v513
        %v534 = vmul.f32 %v402, %v515
        %v535 = vmul.f32 %v405, %v515
        %v536 = vmul.f32 %v410, %v509
        %v537 = vmul.f32 %v413, %v509
        %v538 = vmul.f32 %v410, %v511
        %v539 = vmul.f32 %v413, %v511
        %v540 = vmul.f32 %v410, %v513
        %v541 = vmul.f32 %v413, %v513
        %v542 = vmul.f32 %v410, %v515
        %v543 = vmul.f32 %v413, %v515
        %v544 = vmul.f32 %v418, %v509
        %v545 = vmul.f32 %v421, %v509
        %v546 = vmul.f32 %v418, %v511
        %v547 = vmul.f32 %v421, %v511
        %v548 = vmul.f32 %v418, %v513
        %v549 = vmul.f32 %v421, %v513
        %v550 = vmul.f32 %v418, %v515
        %v551 = vmul.f32 %v421, %v515
        %v552 = vpack.c.bf16 %v521, %v520
        %v553 = vpack.c.bf16 %v523, %v522
        %v554 = vpack.c.bf16 %v525, %v524
        %v555 = vpack.c.bf16 %v527, %v526
        %v556 = vpack.c.bf16 %v529, %v528
        %v557 = vpack.c.bf16 %v531, %v530
        %v558 = vpack.c.bf16 %v533, %v532
        %v559 = vpack.c.bf16 %v535, %v534
        %v560 = vpack.c.bf16 %v537, %v536
        %v561 = vpack.c.bf16 %v539, %v538
        %v562 = vpack.c.bf16 %v541, %v540
        %v563 = vpack.c.bf16 %v543, %v542
        %v564 = vpack.c.bf16 %v545, %v544
        %v565 = vpack.c.bf16 %v547, %v546
        %v566 = vpack.c.bf16 %v549, %v548
        %v567 = vpack.c.bf16 %v551, %v550
        %568 = vrot.lane.b32.xlu0 %v443, 64
        %v569 = vpop.permute.xlu0 %568
        %570 = vrot.lane.b32.xlu0 %v447, 64
        %v571 = vpop.permute.xlu0 %570
        %572 = vrot.lane.b32.xlu0 %v451, 64
        %v573 = vpop.permute.xlu0 %572
        %574 = vrot.lane.b32.xlu0 %v455, 64
        %v575 = vpop.permute.xlu0 %574
        %v580 = vmul.f32 %v394, %v569
        %v581 = vmul.f32 %v397, %v569
        %v582 = vmul.f32 %v394, %v571
        %v583 = vmul.f32 %v397, %v571
        %v584 = vmul.f32 %v394, %v573
        %v585 = vmul.f32 %v397, %v573
        %v586 = vmul.f32 %v394, %v575
        %v587 = vmul.f32 %v397, %v575
        %v588 = vmul.f32 %v402, %v569
        %v589 = vmul.f32 %v405, %v569
        %v590 = vmul.f32 %v402, %v571
        %v591 = vmul.f32 %v405, %v571
        %v592 = vmul.f32 %v402, %v573
        %v593 = vmul.f32 %v405, %v573
        %v594 = vmul.f32 %v402, %v575
        %v595 = vmul.f32 %v405, %v575
        %v596 = vmul.f32 %v410, %v569
        %v597 = vmul.f32 %v413, %v569
        %v598 = vmul.f32 %v410, %v571
        %v599 = vmul.f32 %v413, %v571
        %v600 = vmul.f32 %v410, %v573
        %v601 = vmul.f32 %v413, %v573
        %v602 = vmul.f32 %v410, %v575
        %v603 = vmul.f32 %v413, %v575
        %v604 = vmul.f32 %v418, %v569
        %v605 = vmul.f32 %v421, %v569
        %v606 = vmul.f32 %v418, %v571
        %v607 = vmul.f32 %v421, %v571
        %v608 = vmul.f32 %v418, %v573
        %v609 = vmul.f32 %v421, %v573
        %v610 = vmul.f32 %v418, %v575
        %v611 = vmul.f32 %v421, %v575
        %v612 = vpack.c.bf16 %v581, %v580
        %v613 = vpack.c.bf16 %v583, %v582
        %v614 = vpack.c.bf16 %v585, %v584
        %v615 = vpack.c.bf16 %v587, %v586
        %v616 = vpack.c.bf16 %v589, %v588
        %v617 = vpack.c.bf16 %v591, %v590
        %v618 = vpack.c.bf16 %v593, %v592
        %v619 = vpack.c.bf16 %v595, %v594
        %v620 = vpack.c.bf16 %v597, %v596
        %v621 = vpack.c.bf16 %v599, %v598
        %v622 = vpack.c.bf16 %v601, %v600
        %v623 = vpack.c.bf16 %v603, %v602
        %v624 = vpack.c.bf16 %v605, %v604
        %v625 = vpack.c.bf16 %v607, %v606
        %v626 = vpack.c.bf16 %v609, %v608
        %v627 = vpack.c.bf16 %v611, %v610
        %632 = vrot.lane.b32.xlu0 %v552, 96
        %v633 = vpop.permute.xlu0 %632
        %634 = vrot.lane.b32.xlu0 %v553, 96
        %v635 = vpop.permute.xlu0 %634
        %636 = vrot.lane.b32.xlu0 %v554, 96
        %v637 = vpop.permute.xlu0 %636
        %638 = vrot.lane.b32.xlu0 %v555, 96
        %v639 = vpop.permute.xlu0 %638
        %v641 = vsel %vm346, %v492, 0
        %v644 = vsel %vm346, %v493, 0
        %v647 = vsel %vm346, %v494, 0
        %v650 = vsel %vm346, %v495, 0
        %v653 = vsel %vm346, %v633, 0
        %v656 = vsel %vm346, %v635, 0
        %v659 = vsel %vm346, %v637, 0
        %v662 = vsel %vm346, %v639, 0
        %664 = vmatprep.subr.bf16.mxu0 0
        %665 = vmatpush1.bf16.xpose.msra.mxu0 %v653
        %666 = vmatprep.subr.bf16.mxu0 0
        %667 = vmatpush1.bf16.xpose.msra.mxu0 %v656
        %668 = vmatprep.subr.bf16.mxu0 0
        %669 = vmatpush1.bf16.xpose.msra.mxu0 %v659
        %670 = vmatprep.subr.bf16.mxu0 0
        %671 = vmatpush1.bf16.xpose.msra.mxu0 %v662
        %672 = vmatprep.subr.bf16.mxu0 0
        %673 = vmatpush1.bf16.xpose.msra.mxu0 0
        %674 = vmatprep.subr.bf16.mxu0 0
        %675 = vmatpush1.bf16.xpose.msra.mxu0 0
        %676 = vmatprep.subr.bf16.mxu0 0
        %677 = vmatpush1.bf16.xpose.msra.mxu0 0
        %678 = vmatprep.subr.bf16.mxu0 0
        %679 = vmatpush1.bf16.xpose.msra.mxu0 0
        %680 = vmatprep.subr.bf16.mxu0 0
        %681 = vmatpush1.bf16.xpose.msra.mxu0 0
        %682 = vmatprep.subr.bf16.mxu0 0
        %683 = vmatpush1.bf16.xpose.msra.mxu0 0
        %684 = vmatprep.subr.bf16.mxu0 0
        %685 = vmatpush1.bf16.xpose.msra.mxu0 0
        %686 = vmatprep.subr.bf16.mxu0 0
        %687 = vmatpush1.bf16.xpose.msra.mxu0 0
        %688 = vmatprep.subr.bf16.mxu0 0
        %689 = vmatpush1.bf16.xpose.msra.mxu0 0
        %690 = vmatprep.subr.bf16.mxu0 0
        %691 = vmatpush1.bf16.xpose.msra.mxu0 0
        %692 = vmatprep.subr.bf16.mxu0 0
        %693 = vmatpush1.bf16.xpose.msra.mxu0 0
        %694 = vmatprep.subr.bf16.mxu0 0
        %695 = vmatpush1.bf16.xpose.msra.mxu0 0
        %696 = vmatprep.mubr.bf16.mxu0 0
        %697 = vmatmul.mubr.bf16.gmra.mrb[0].mxu0 %v641
        %v698 = vpop.f32.mrb[0].mxu0
        %v699 = vadd.f32 0.0, %v698
        %v700 = vpop.f32.mrb[0].mxu0
        %v701 = vpop.f32.mrb[0].mxu0
        %v702 = vadd.f32 0.0, %v701
        %v703 = vpop.f32.mrb[0].mxu0
        %704 = vmatprep.mubr.bf16.mxu0 0
        %705 = vmatmul.mubr.bf16.gmra.mrb[0].mxu0 %v644
        %v706 = vpop.f32.mrb[0].mxu0
        %v707 = vadd.f32 0.0, %v706
        %v708 = vpop.f32.mrb[0].mxu0
        %v709 = vpop.f32.mrb[0].mxu0
        %v710 = vadd.f32 0.0, %v709
        %v711 = vpop.f32.mrb[0].mxu0
        %712 = vmatprep.mubr.bf16.mxu0 0
        %713 = vmatmul.mubr.bf16.gmra.mrb[0].mxu0 %v647
        %v714 = vpop.f32.mrb[0].mxu0
        %v715 = vadd.f32 0.0, %v714
        %v716 = vpop.f32.mrb[0].mxu0
        %v717 = vpop.f32.mrb[0].mxu0
        %v718 = vadd.f32 0.0, %v717
        %v719 = vpop.f32.mrb[0].mxu0
        %720 = vmatprep.mubr.bf16.mxu0 0
        %721 = vmatmul.mubr.bf16.gmra.mrb[0].mxu0 %v650
        %v722 = vpop.f32.mrb[0].mxu0
        %v723 = vadd.f32 0.0, %v722
        %v724 = vpop.f32.mrb[0].mxu0
        %v725 = vpop.f32.mrb[0].mxu0
        %v726 = vadd.f32 0.0, %v725
        %v727 = vpop.f32.mrb[0].mxu0
        %728 = vdwg.mxu0
        %733 = vrot.lane.b32.xlu0 %v556, 96
        %v734 = vpop.permute.xlu0 %733
        %735 = vrot.lane.b32.xlu0 %v557, 96
        %v736 = vpop.permute.xlu0 %735
        %737 = vrot.lane.b32.xlu0 %v558, 96
        %v738 = vpop.permute.xlu0 %737
        %739 = vrot.lane.b32.xlu0 %v559, 96
        %v740 = vpop.permute.xlu0 %739
        %v742 = vsel %vm346, %v496, 0
        %v745 = vsel %vm346, %v497, 0
        %v748 = vsel %vm346, %v498, 0
        %v751 = vsel %vm346, %v499, 0
        %v754 = vsel %vm346, %v734, 0
        %v757 = vsel %vm346, %v736, 0
        %v760 = vsel %vm346, %v738, 0
        %v763 = vsel %vm346, %v740, 0
        %765 = vmatprep.subr.bf16.mxu0 0
        %766 = vmatpush1.bf16.xpose.msra.mxu0 %v754
        %767 = vmatprep.subr.bf16.mxu0 0
        %768 = vmatpush1.bf16.xpose.msra.mxu0 %v757
        %769 = vmatprep.subr.bf16.mxu0 0
        %770 = vmatpush1.bf16.xpose.msra.mxu0 %v760
        %771 = vmatprep.subr.bf16.mxu0 0
        %772 = vmatpush1.bf16.xpose.msra.mxu0 %v763
        %773 = vmatprep.subr.bf16.mxu0 0
        %774 = vmatpush1.bf16.xpose.msra.mxu0 0
        %775 = vmatprep.subr.bf16.mxu0 0
        %776 = vmatpush1.bf16.xpose.msra.mxu0 0
        %777 = vmatprep.subr.bf16.mxu0 0
        %778 = vmatpush1.bf16.xpose.msra.mxu0 0
        %779 = vmatprep.subr.bf16.mxu0 0
        %780 = vmatpush1.bf16.xpose.msra.mxu0 0
        %781 = vmatprep.subr.bf16.mxu0 0
        %782 = vmatpush1.bf16.xpose.msra.mxu0 0
        %783 = vmatprep.subr.bf16.mxu0 0
        %784 = vmatpush1.bf16.xpose.msra.mxu0 0
        %785 = vmatprep.subr.bf16.mxu0 0
        %786 = vmatpush1.bf16.xpose.msra.mxu0 0
        %787 = vmatprep.subr.bf16.mxu0 0
        %788 = vmatpush1.bf16.xpose.msra.mxu0 0
        %789 = vmatprep.subr.bf16.mxu0 0
        %790 = vmatpush1.bf16.xpose.msra.mxu0 0
        %791 = vmatprep.subr.bf16.mxu0 0
        %792 = vmatpush1.bf16.xpose.msra.mxu0 0
        %793 = vmatprep.subr.bf16.mxu0 0
        %794 = vmatpush1.bf16.xpose.msra.mxu0 0
        %795 = vmatprep.subr.bf16.mxu0 0
        %796 = vmatpush1.bf16.xpose.msra.mxu0 0
        %797 = vmatprep.mubr.bf16.mxu0 0
        %798 = vmatmul.mubr.bf16.gmra.mrb[0].mxu0 %v742
        %v799 = vpop.f32.mrb[0].mxu0
        %v800 = vadd.f32 0.0, %v799
        %v801 = vpop.f32.mrb[0].mxu0
        %v802 = vpop.f32.mrb[0].mxu0
        %v803 = vadd.f32 0.0, %v802
        %v804 = vpop.f32.mrb[0].mxu0
        %805 = vmatprep.mubr.bf16.mxu0 0
        %806 = vmatmul.mubr.bf16.gmra.mrb[0].mxu0 %v745
        %v807 = vpop.f32.mrb[0].mxu0
        %v808 = vadd.f32 0.0, %v807
        %v809 = vpop.f32.mrb[0].mxu0
        %v810 = vpop.f32.mrb[0].mxu0
        %v811 = vadd.f32 0.0, %v810
        %v812 = vpop.f32.mrb[0].mxu0
        %813 = vmatprep.mubr.bf16.mxu0 0
        %814 = vmatmul.mubr.bf16.gmra.mrb[0].mxu0 %v748
        %v815 = vpop.f32.mrb[0].mxu0
        %v816 = vadd.f32 0.0, %v815
        %v817 = vpop.f32.mrb[0].mxu0
        %v818 = vpop.f32.mrb[0].mxu0
        %v819 = vadd.f32 0.0, %v818
        %v820 = vpop.f32.mrb[0].mxu0
        %821 = vmatprep.mubr.bf16.mxu0 0
        %822 = vmatmul.mubr.bf16.gmra.mrb[0].mxu0 %v751
        %v823 = vpop.f32.mrb[0].mxu0
        %v824 = vadd.f32 0.0, %v823
        %v825 = vpop.f32.mrb[0].mxu0
        %v826 = vpop.f32.mrb[0].mxu0
        %v827 = vadd.f32 0.0, %v826
        %v828 = vpop.f32.mrb[0].mxu0
        %829 = vdwg.mxu0
        %834 = vrot.lane.b32.xlu0 %v560, 96
        %v835 = vpop.permute.xlu0 %834
        %836 = vrot.lane.b32.xlu0 %v561, 96
        %v837 = vpop.permute.xlu0 %836
        %838 = vrot.lane.b32.xlu0 %v562, 96
        %v839 = vpop.permute.xlu0 %838
        %840 = vrot.lane.b32.xlu0 %v563, 96
        %v841 = vpop.permute.xlu0 %840
        %v843 = vsel %vm346, %v500, 0
        %v846 = vsel %vm346, %v501, 0
        %v849 = vsel %vm346, %v502, 0
        %v852 = vsel %vm346, %v503, 0
        %v855 = vsel %vm346, %v835, 0
        %v858 = vsel %vm346, %v837, 0
        %v861 = vsel %vm346, %v839, 0
        %v864 = vsel %vm346, %v841, 0
        %866 = vmatprep.subr.bf16.mxu0 0
        %867 = vmatpush1.bf16.xpose.msra.mxu0 %v855
        %868 = vmatprep.subr.bf16.mxu0 0
        %869 = vmatpush1.bf16.xpose.msra.mxu0 %v858
        %870 = vmatprep.subr.bf16.mxu0 0
        %871 = vmatpush1.bf16.xpose.msra.mxu0 %v861
        %872 = vmatprep.subr.bf16.mxu0 0
        %873 = vmatpush1.bf16.xpose.msra.mxu0 %v864
        %874 = vmatprep.subr.bf16.mxu0 0
        %875 = vmatpush1.bf16.xpose.msra.mxu0 0
        %876 = vmatprep.subr.bf16.mxu0 0
        %877 = vmatpush1.bf16.xpose.msra.mxu0 0
        %878 = vmatprep.subr.bf16.mxu0 0
        %879 = vmatpush1.bf16.xpose.msra.mxu0 0
        %880 = vmatprep.subr.bf16.mxu0 0
        %881 = vmatpush1.bf16.xpose.msra.mxu0 0
        %882 = vmatprep.subr.bf16.mxu0 0
        %883 = vmatpush1.bf16.xpose.msra.mxu0 0
        %884 = vmatprep.subr.bf16.mxu0 0
        %885 = vmatpush1.bf16.xpose.msra.mxu0 0
        %886 = vmatprep.subr.bf16.mxu0 0
        %887 = vmatpush1.bf16.xpose.msra.mxu0 0
        %888 = vmatprep.subr.bf16.mxu0 0
        %889 = vmatpush1.bf16.xpose.msra.mxu0 0
        %890 = vmatprep.subr.bf16.mxu0 0
        %891 = vmatpush1.bf16.xpose.msra.mxu0 0
        %892 = vmatprep.subr.bf16.mxu0 0
        %893 = vmatpush1.bf16.xpose.msra.mxu0 0
        %894 = vmatprep.subr.bf16.mxu0 0
        %895 = vmatpush1.bf16.xpose.msra.mxu0 0
        %896 = vmatprep.subr.bf16.mxu0 0
        %897 = vmatpush1.bf16.xpose.msra.mxu0 0
        %898 = vmatprep.mubr.bf16.mxu0 0
        %899 = vmatmul.mubr.bf16.gmra.mrb[0].mxu0 %v843
        %v900 = vpop.f32.mrb[0].mxu0
        %v901 = vadd.f32 0.0, %v900
        %v902 = vpop.f32.mrb[0].mxu0
        %v903 = vpop.f32.mrb[0].mxu0
        %v904 = vadd.f32 0.0, %v903
        %v905 = vpop.f32.mrb[0].mxu0
        %906 = vmatprep.mubr.bf16.mxu0 0
        %907 = vmatmul.mubr.bf16.gmra.mrb[0].mxu0 %v846
        %v908 = vpop.f32.mrb[0].mxu0
        %v909 = vadd.f32 0.0, %v908
        %v910 = vpop.f32.mrb[0].mxu0
        %v911 = vpop.f32.mrb[0].mxu0
        %v912 = vadd.f32 0.0, %v911
        %v913 = vpop.f32.mrb[0].mxu0
        %914 = vmatprep.mubr.bf16.mxu0 0
        %915 = vmatmul.mubr.bf16.gmra.mrb[0].mxu0 %v849
        %v916 = vpop.f32.mrb[0].mxu0
        %v917 = vadd.f32 0.0, %v916
        %v918 = vpop.f32.mrb[0].mxu0
        %v919 = vpop.f32.mrb[0].mxu0
        %v920 = vadd.f32 0.0, %v919
        %v921 = vpop.f32.mrb[0].mxu0
        %922 = vmatprep.mubr.bf16.mxu0 0
        %923 = vmatmul.mubr.bf16.gmra.mrb[0].mxu0 %v852
        %v924 = vpop.f32.mrb[0].mxu0
        %v925 = vadd.f32 0.0, %v924
        %v926 = vpop.f32.mrb[0].mxu0
        %v927 = vpop.f32.mrb[0].mxu0
        %v928 = vadd.f32 0.0, %v927
        %v929 = vpop.f32.mrb[0].mxu0
        %930 = vdwg.mxu0
        %935 = vrot.lane.b32.xlu0 %v564, 96
        %v936 = vpop.permute.xlu0 %935
        %937 = vrot.lane.b32.xlu0 %v565, 96
        %v938 = vpop.permute.xlu0 %937
        %939 = vrot.lane.b32.xlu0 %v566, 96
        %v940 = vpop.permute.xlu0 %939
        %941 = vrot.lane.b32.xlu0 %v567, 96
        %v942 = vpop.permute.xlu0 %941
        %v944 = vsel %vm346, %v504, 0
        %v947 = vsel %vm346, %v505, 0
        %v950 = vsel %vm346, %v506, 0
        %v953 = vsel %vm346, %v507, 0
        %v956 = vsel %vm346, %v936, 0
        %v959 = vsel %vm346, %v938, 0
        %v962 = vsel %vm346, %v940, 0
        %v965 = vsel %vm346, %v942, 0
        %967 = vmatprep.subr.bf16.mxu0 0
        %968 = vmatpush1.bf16.xpose.msra.mxu0 %v956
        %969 = vmatprep.subr.bf16.mxu0 0
        %970 = vmatpush1.bf16.xpose.msra.mxu0 %v959
        %971 = vmatprep.subr.bf16.mxu0 0
        %972 = vmatpush1.bf16.xpose.msra.mxu0 %v962
        %973 = vmatprep.subr.bf16.mxu0 0
        %974 = vmatpush1.bf16.xpose.msra.mxu0 %v965
        %975 = vmatprep.subr.bf16.mxu0 0
        %976 = vmatpush1.bf16.xpose.msra.mxu0 0
        %977 = vmatprep.subr.bf16.mxu0 0
        %978 = vmatpush1.bf16.xpose.msra.mxu0 0
        %979 = vmatprep.subr.bf16.mxu0 0
        %980 = vmatpush1.bf16.xpose.msra.mxu0 0
        %981 = vmatprep.subr.bf16.mxu0 0
        %982 = vmatpush1.bf16.xpose.msra.mxu0 0
        %983 = vmatprep.subr.bf16.mxu0 0
        %984 = vmatpush1.bf16.xpose.msra.mxu0 0
        %985 = vmatprep.subr.bf16.mxu0 0
        %986 = vmatpush1.bf16.xpose.msra.mxu0 0
        %987 = vmatprep.subr.bf16.mxu0 0
        %988 = vmatpush1.bf16.xpose.msra.mxu0 0
        %989 = vmatprep.subr.bf16.mxu0 0
        %990 = vmatpush1.bf16.xpose.msra.mxu0 0
        %991 = vmatprep.subr.bf16.mxu0 0
        %992 = vmatpush1.bf16.xpose.msra.mxu0 0
        %993 = vmatprep.subr.bf16.mxu0 0
        %994 = vmatpush1.bf16.xpose.msra.mxu0 0
        %995 = vmatprep.subr.bf16.mxu0 0
        %996 = vmatpush1.bf16.xpose.msra.mxu0 0
        %997 = vmatprep.subr.bf16.mxu0 0
        %998 = vmatpush1.bf16.xpose.msra.mxu0 0
        %999 = vmatprep.mubr.bf16.mxu0 0
        %1000 = vmatmul.mubr.bf16.gmra.mrb[0].mxu0 %v944
        %v1001 = vpop.f32.mrb[0].mxu0
        %v1002 = vadd.f32 0.0, %v1001
        %v1003 = vpop.f32.mrb[0].mxu0
        %v1004 = vpop.f32.mrb[0].mxu0
        %v1005 = vadd.f32 0.0, %v1004
        %v1006 = vpop.f32.mrb[0].mxu0
        %1007 = vmatprep.mubr.bf16.mxu0 0
        %1008 = vmatmul.mubr.bf16.gmra.mrb[0].mxu0 %v947
        %v1009 = vpop.f32.mrb[0].mxu0
        %v1010 = vadd.f32 0.0, %v1009
        %v1011 = vpop.f32.mrb[0].mxu0
        %v1012 = vpop.f32.mrb[0].mxu0
        %v1013 = vadd.f32 0.0, %v1012
        %v1014 = vpop.f32.mrb[0].mxu0
        %1015 = vmatprep.mubr.bf16.mxu0 0
        %1016 = vmatmul.mubr.bf16.gmra.mrb[0].mxu0 %v950
        %v1017 = vpop.f32.mrb[0].mxu0
        %v1018 = vadd.f32 0.0, %v1017
        %v1019 = vpop.f32.mrb[0].mxu0
        %v1020 = vpop.f32.mrb[0].mxu0
        %v1021 = vadd.f32 0.0, %v1020
        %v1022 = vpop.f32.mrb[0].mxu0
        %1023 = vmatprep.mubr.bf16.mxu0 0
        %1024 = vmatmul.mubr.bf16.gmra.mrb[0].mxu0 %v953
        %v1025 = vpop.f32.mrb[0].mxu0
        %v1026 = vadd.f32 0.0, %v1025
        %v1027 = vpop.f32.mrb[0].mxu0
        %v1028 = vpop.f32.mrb[0].mxu0
        %v1029 = vadd.f32 0.0, %v1028
        %v1030 = vpop.f32.mrb[0].mxu0
        %1031 = vdwg.mxu0
        %v1032 = vld [vmem:[#allocation5] sm:$0xff]
        %v1033 = vld [vmem:[#allocation5 + $0x8] sm:$0xff]
        %v1034 = vld [vmem:[#allocation5 + $0x10] sm:$0xff]
        %v1035 = vld [vmem:[#allocation5 + $0x18] sm:$0xff]
        %v1036 = vld [vmem:[#allocation5 + $0x20] sm:$0xff]
        %v1037 = vld [vmem:[#allocation5 + $0x28] sm:$0xff]
        %v1038 = vld [vmem:[#allocation5 + $0x30] sm:$0xff]
        %v1039 = vld [vmem:[#allocation5 + $0x38] sm:$0xff]
        %v1040 = vld [vmem:[#allocation5 + $0x40] sm:$0xff]
        %v1041 = vld [vmem:[#allocation5 + $0x48] sm:$0xff]
        %v1042 = vld [vmem:[#allocation5 + $0x50] sm:$0xff]
        %v1043 = vld [vmem:[#allocation5 + $0x58] sm:$0xff]
        %v1044 = vld [vmem:[#allocation5 + $0x60] sm:$0xff]
        %v1045 = vld [vmem:[#allocation5 + $0x68] sm:$0xff]
        %v1046 = vld [vmem:[#allocation5 + $0x70] sm:$0xff]
        %v1047 = vld [vmem:[#allocation5 + $0x78] sm:$0xff]
        %v1048 = vld [vmem:[#allocation5 + $0x80] sm:$0xff]
        %v1049 = vld [vmem:[#allocation5 + $0x88] sm:$0xff]
        %v1050 = vld [vmem:[#allocation5 + $0x90] sm:$0xff]
        %v1051 = vld [vmem:[#allocation5 + $0x98] sm:$0xff]
        %v1052 = vld [vmem:[#allocation5 + $0xa0] sm:$0xff]
        %v1053 = vld [vmem:[#allocation5 + $0xa8] sm:$0xff]
        %v1054 = vld [vmem:[#allocation5 + $0xb0] sm:$0xff]
        %v1055 = vld [vmem:[#allocation5 + $0xb8] sm:$0xff]
        %v1056 = vld [vmem:[#allocation5 + $0xc0] sm:$0xff]
        %v1057 = vld [vmem:[#allocation5 + $0xc8] sm:$0xff]
        %v1058 = vld [vmem:[#allocation5 + $0xd0] sm:$0xff]
        %v1059 = vld [vmem:[#allocation5 + $0xd8] sm:$0xff]
        %v1060 = vld [vmem:[#allocation5 + $0xe0] sm:$0xff]
        %v1061 = vld [vmem:[#allocation5 + $0xe8] sm:$0xff]
        %v1062 = vld [vmem:[#allocation5 + $0xf0] sm:$0xff]
        %v1063 = vld [vmem:[#allocation5 + $0xf8] sm:$0xff]
        %v1064 = vadd.f32 %v699, %v1032
        %v1065 = vadd.f32 %v702, %v1033
        %v1066 = vadd.f32 %v707, %v1034
        %v1067 = vadd.f32 %v710, %v1035
        %v1068 = vadd.f32 %v715, %v1036
        %v1069 = vadd.f32 %v718, %v1037
        %v1070 = vadd.f32 %v723, %v1038
        %v1071 = vadd.f32 %v726, %v1039
        %v1072 = vadd.f32 %v800, %v1040
        %v1073 = vadd.f32 %v803, %v1041
        %v1074 = vadd.f32 %v808, %v1042
        %v1075 = vadd.f32 %v811, %v1043
        %v1076 = vadd.f32 %v816, %v1044
        %v1077 = vadd.f32 %v819, %v1045
        %v1078 = vadd.f32 %v824, %v1046
        %v1079 = vadd.f32 %v827, %v1047
        %v1080 = vadd.f32 %v901, %v1048
        %v1081 = vadd.f32 %v904, %v1049
        %v1082 = vadd.f32 %v909, %v1050
        %v1083 = vadd.f32 %v912, %v1051
        %v1084 = vadd.f32 %v917, %v1052
        %v1085 = vadd.f32 %v920, %v1053
        %v1086 = vadd.f32 %v925, %v1054
        %v1087 = vadd.f32 %v928, %v1055
        %v1088 = vadd.f32 %v1002, %v1056
        %v1089 = vadd.f32 %v1005, %v1057
        %v1090 = vadd.f32 %v1010, %v1058
        %v1091 = vadd.f32 %v1013, %v1059
        %v1092 = vadd.f32 %v1018, %v1060
        %v1093 = vadd.f32 %v1021, %v1061
        %v1094 = vadd.f32 %v1026, %v1062
        %v1095 = vadd.f32 %v1029, %v1063
        %vm1096 = vcmask 523264
        %v1097 = vsel %vm1096, %v1064, -inf
        %1098 = vmax.xlane.f32.xlu0 %v1097
        %v1099 = vpop.xlane.xlu0 %1098
        %v1100 = vsel %vm1096, %v1065, -inf
        %1101 = vmax.xlane.f32.xlu0 %v1100
        %v1102 = vpop.xlane.xlu0 %1101
        %v1103 = vsel %vm1096, %v1066, -inf
        %1104 = vmax.xlane.f32.xlu0 %v1103
        %v1105 = vpop.xlane.xlu0 %1104
        %v1106 = vsel %vm1096, %v1067, -inf
        %1107 = vmax.xlane.f32.xlu0 %v1106
        %v1108 = vpop.xlane.xlu0 %1107
        %v1109 = vsel %vm1096, %v1068, -inf
        %1110 = vmax.xlane.f32.xlu0 %v1109
        %v1111 = vpop.xlane.xlu0 %1110
        %v1112 = vsel %vm1096, %v1069, -inf
        %1113 = vmax.xlane.f32.xlu0 %v1112
        %v1114 = vpop.xlane.xlu0 %1113
        %v1115 = vsel %vm1096, %v1070, -inf
        %1116 = vmax.xlane.f32.xlu0 %v1115
        %v1117 = vpop.xlane.xlu0 %1116
        %v1118 = vsel %vm1096, %v1071, -inf
        %1119 = vmax.xlane.f32.xlu0 %v1118
        %v1120 = vpop.xlane.xlu0 %1119
        %v1121 = vsel %vm1096, %v1072, -inf
        %1122 = vmax.xlane.f32.xlu0 %v1121
        %v1123 = vpop.xlane.xlu0 %1122
        %v1124 = vsel %vm1096, %v1073, -inf
        %1125 = vmax.xlane.f32.xlu0 %v1124
        %v1126 = vpop.xlane.xlu0 %1125
        %v1127 = vsel %vm1096, %v1074, -inf
        %1128 = vmax.xlane.f32.xlu0 %v1127
        %v1129 = vpop.xlane.xlu0 %1128
        %v1130 = vsel %vm1096, %v1075, -inf
        %1131 = vmax.xlane.f32.xlu0 %v1130
        %v1132 = vpop.xlane.xlu0 %1131
        %v1133 = vsel %vm1096, %v1076, -inf
        %1134 = vmax.xlane.f32.xlu0 %v1133
        %v1135 = vpop.xlane.xlu0 %1134
        %v1136 = vsel %vm1096, %v1077, -inf
        %1137 = vmax.xlane.f32.xlu0 %v1136
        %v1138 = vpop.xlane.xlu0 %1137
        %v1139 = vsel %vm1096, %v1078, -inf
        %1140 = vmax.xlane.f32.xlu0 %v1139
        %v1141 = vpop.xlane.xlu0 %1140
        %v1142 = vsel %vm1096, %v1079, -inf
        %1143 = vmax.xlane.f32.xlu0 %v1142
        %v1144 = vpop.xlane.xlu0 %1143
        %v1145 = vsel %vm1096, %v1080, -inf
        %1146 = vmax.xlane.f32.xlu0 %v1145
        %v1147 = vpop.xlane.xlu0 %1146
        %v1148 = vsel %vm1096, %v1081, -inf
        %1149 = vmax.xlane.f32.xlu0 %v1148
        %v1150 = vpop.xlane.xlu0 %1149
        %v1151 = vsel %vm1096, %v1082, -inf
        %1152 = vmax.xlane.f32.xlu0 %v1151
        %v1153 = vpop.xlane.xlu0 %1152
        %v1154 = vsel %vm1096, %v1083, -inf
        %1155 = vmax.xlane.f32.xlu0 %v1154
        %v1156 = vpop.xlane.xlu0 %1155
        %v1157 = vsel %vm1096, %v1084, -inf
        %1158 = vmax.xlane.f32.xlu0 %v1157
        %v1159 = vpop.xlane.xlu0 %1158
        %v1160 = vsel %vm1096, %v1085, -inf
        %1161 = vmax.xlane.f32.xlu0 %v1160
        %v1162 = vpop.xlane.xlu0 %1161
        %v1163 = vsel %vm1096, %v1086, -inf
        %1164 = vmax.xlane.f32.xlu0 %v1163
        %v1165 = vpop.xlane.xlu0 %1164
        %v1166 = vsel %vm1096, %v1087, -inf
        %1167 = vmax.xlane.f32.xlu0 %v1166
        %v1168 = vpop.xlane.xlu0 %1167
        %v1169 = vsel %vm1096, %v1088, -inf
        %1170 = vmax.xlane.f32.xlu0 %v1169
        %v1171 = vpop.xlane.xlu0 %1170
        %v1172 = vsel %vm1096, %v1089, -inf
        %1173 = vmax.xlane.f32.xlu0 %v1172
        %v1174 = vpop.xlane.xlu0 %1173
        %v1175 = vsel %vm1096, %v1090, -inf
        %1176 = vmax.xlane.f32.xlu0 %v1175
        %v1177 = vpop.xlane.xlu0 %1176
        %v1178 = vsel %vm1096, %v1091, -inf
        %1179 = vmax.xlane.f32.xlu0 %v1178
        %v1180 = vpop.xlane.xlu0 %1179
        %v1181 = vsel %vm1096, %v1092, -inf
        %1182 = vmax.xlane.f32.xlu0 %v1181
        %v1183 = vpop.xlane.xlu0 %1182
        %v1184 = vsel %vm1096, %v1093, -inf
        %1185 = vmax.xlane.f32.xlu0 %v1184
        %v1186 = vpop.xlane.xlu0 %1185
        %v1187 = vsel %vm1096, %v1094, -inf
        %1188 = vmax.xlane.f32.xlu0 %v1187
        %v1189 = vpop.xlane.xlu0 %1188
        %v1190 = vsel %vm1096, %v1095, -inf
        %1191 = vmax.xlane.f32.xlu0 %v1190
        %v1192 = vpop.xlane.xlu0 %1191
        %v1193 = vsub.f32 %v1064, %v1099
        %v1194 = vsub.f32 %v1065, %v1102
        %v1195 = vsub.f32 %v1066, %v1105
        %v1196 = vsub.f32 %v1067, %v1108
        %v1197 = vsub.f32 %v1068, %v1111
        %v1198 = vsub.f32 %v1069, %v1114
        %v1199 = vsub.f32 %v1070, %v1117
        %v1200 = vsub.f32 %v1071, %v1120
        %v1201 = vsub.f32 %v1072, %v1123
        %v1202 = vsub.f32 %v1073, %v1126
        %v1203 = vsub.f32 %v1074, %v1129
        %v1204 = vsub.f32 %v1075, %v1132
        %v1205 = vsub.f32 %v1076, %v1135
        %v1206 = vsub.f32 %v1077, %v1138
        %v1207 = vsub.f32 %v1078, %v1141
        %v1208 = vsub.f32 %v1079, %v1144
        %v1209 = vsub.f32 %v1080, %v1147
        %v1210 = vsub.f32 %v1081, %v1150
        %v1211 = vsub.f32 %v1082, %v1153
        %v1212 = vsub.f32 %v1083, %v1156
        %v1213 = vsub.f32 %v1084, %v1159
        %v1214 = vsub.f32 %v1085, %v1162
        %v1215 = vsub.f32 %v1086, %v1165
        %v1216 = vsub.f32 %v1087, %v1168
        %v1217 = vsub.f32 %v1088, %v1171
        %v1218 = vsub.f32 %v1089, %v1174
        %v1219 = vsub.f32 %v1090, %v1177
        %v1220 = vsub.f32 %v1091, %v1180
        %v1221 = vsub.f32 %v1092, %v1183
        %v1222 = vsub.f32 %v1093, %v1186
        %v1223 = vsub.f32 %v1094, %v1189
        %v1224 = vsub.f32 %v1095, %v1192
        %v1225 = vmul.f32 %v1193, 1.442695
        %v1226 = vpow.pop %v1225
        %v1227 = vmul.f32 %v1194, 1.442695
        %v1228 = vpow.pop %v1227
        %v1229 = vmul.f32 %v1195, 1.442695
        %v1230 = vpow.pop %v1229
        %v1231 = vmul.f32 %v1196, 1.442695
        %v1232 = vpow.pop %v1231
        %v1233 = vmul.f32 %v1197, 1.442695
        %v1234 = vpow.pop %v1233
        %v1235 = vmul.f32 %v1198, 1.442695
        %v1236 = vpow.pop %v1235
        %v1237 = vmul.f32 %v1199, 1.442695
        %v1238 = vpow.pop %v1237
        %v1239 = vmul.f32 %v1200, 1.442695
        %v1240 = vpow.pop %v1239
        %v1241 = vmul.f32 %v1201, 1.442695
        %v1242 = vpow.pop %v1241
        %v1243 = vmul.f32 %v1202, 1.442695
        %v1244 = vpow.pop %v1243
        %v1245 = vmul.f32 %v1203, 1.442695
        %v1246 = vpow.pop %v1245
        %v1247 = vmul.f32 %v1204, 1.442695
        %v1248 = vpow.pop %v1247
        %v1249 = vmul.f32 %v1205, 1.442695
        %v1250 = vpow.pop %v1249
        %v1251 = vmul.f32 %v1206, 1.442695
        %v1252 = vpow.pop %v1251
        %v1253 = vmul.f32 %v1207, 1.442695
        %v1254 = vpow.pop %v1253
        %v1255 = vmul.f32 %v1208, 1.442695
        %v1256 = vpow.pop %v1255
        %v1257 = vmul.f32 %v1209, 1.442695
        %v1258 = vpow.pop %v1257
        %v1259 = vmul.f32 %v1210, 1.442695
        %v1260 = vpow.pop %v1259
        %v1261 = vmul.f32 %v1211, 1.442695
        %v1262 = vpow.pop %v1261
        %v1263 = vmul.f32 %v1212, 1.442695
        %v1264 = vpow.pop %v1263
        %v1265 = vmul.f32 %v1213, 1.442695
        %v1266 = vpow.pop %v1265
        %v1267 = vmul.f32 %v1214, 1.442695
        %v1268 = vpow.pop %v1267
        %v1269 = vmul.f32 %v1215, 1.442695
        %v1270 = vpow.pop %v1269
        %v1271 = vmul.f32 %v1216, 1.442695
        %v1272 = vpow.pop %v1271
        %v1273 = vmul.f32 %v1217, 1.442695
        %v1274 = vpow.pop %v1273
        %v1275 = vmul.f32 %v1218, 1.442695
        %v1276 = vpow.pop %v1275
        %v1277 = vmul.f32 %v1219, 1.442695
        %v1278 = vpow.pop %v1277
        %v1279 = vmul.f32 %v1220, 1.442695
        %v1280 = vpow.pop %v1279
        %v1281 = vmul.f32 %v1221, 1.442695
        %v1282 = vpow.pop %v1281
        %v1283 = vmul.f32 %v1222, 1.442695
        %v1284 = vpow.pop %v1283
        %v1285 = vmul.f32 %v1223, 1.442695
        %v1286 = vpow.pop %v1285
        %v1287 = vmul.f32 %v1224, 1.442695
        %v1288 = vpow.pop %v1287
        %v1289 = vsel %vm1096, %v1226, 0.0
        %1290 = vadd.xlane.f32.xlu0 %v1289
        %v1291 = vpop.xlane.xlu0 %1290
        %v1292 = vsel %vm1096, %v1228, 0.0
        %1293 = vadd.xlane.f32.xlu0 %v1292
        %v1294 = vpop.xlane.xlu0 %1293
        %v1295 = vsel %vm1096, %v1230, 0.0
        %1296 = vadd.xlane.f32.xlu0 %v1295
        %v1297 = vpop.xlane.xlu0 %1296
        %v1298 = vsel %vm1096, %v1232, 0.0
        %1299 = vadd.xlane.f32.xlu0 %v1298
        %v1300 = vpop.xlane.xlu0 %1299
        %v1301 = vsel %vm1096, %v1234, 0.0
        %1302 = vadd.xlane.f32.xlu0 %v1301
        %v1303 = vpop.xlane.xlu0 %1302
        %v1304 = vsel %vm1096, %v1236, 0.0
        %1305 = vadd.xlane.f32.xlu0 %v1304
        %v1306 = vpop.xlane.xlu0 %1305
        %v1307 = vsel %vm1096, %v1238, 0.0
        %1308 = vadd.xlane.f32.xlu0 %v1307
        %v1309 = vpop.xlane.xlu0 %1308
        %v1310 = vsel %vm1096, %v1240, 0.0
        %1311 = vadd.xlane.f32.xlu0 %v1310
        %v1312 = vpop.xlane.xlu0 %1311
        %v1313 = vsel %vm1096, %v1242, 0.0
        %1314 = vadd.xlane.f32.xlu0 %v1313
        %v1315 = vpop.xlane.xlu0 %1314
        %v1316 = vsel %vm1096, %v1244, 0.0
        %1317 = vadd.xlane.f32.xlu0 %v1316
        %v1318 = vpop.xlane.xlu0 %1317
        %v1319 = vsel %vm1096, %v1246, 0.0
        %1320 = vadd.xlane.f32.xlu0 %v1319
        %v1321 = vpop.xlane.xlu0 %1320
        %v1322 = vsel %vm1096, %v1248, 0.0
        %1323 = vadd.xlane.f32.xlu0 %v1322
        %v1324 = vpop.xlane.xlu0 %1323
        %v1325 = vsel %vm1096, %v1250, 0.0
        %1326 = vadd.xlane.f32.xlu0 %v1325
        %v1327 = vpop.xlane.xlu0 %1326
        %v1328 = vsel %vm1096, %v1252, 0.0
        %1329 = vadd.xlane.f32.xlu0 %v1328
        %v1330 = vpop.xlane.xlu0 %1329
        %v1331 = vsel %vm1096, %v1254, 0.0
        %1332 = vadd.xlane.f32.xlu0 %v1331
        %v1333 = vpop.xlane.xlu0 %1332
        %v1334 = vsel %vm1096, %v1256, 0.0
        %1335 = vadd.xlane.f32.xlu0 %v1334
        %v1336 = vpop.xlane.xlu0 %1335
        %v1337 = vsel %vm1096, %v1258, 0.0
        %1338 = vadd.xlane.f32.xlu0 %v1337
        %v1339 = vpop.xlane.xlu0 %1338
        %v1340 = vsel %vm1096, %v1260, 0.0
        %1341 = vadd.xlane.f32.xlu0 %v1340
        %v1342 = vpop.xlane.xlu0 %1341
        %v1343 = vsel %vm1096, %v1262, 0.0
        %1344 = vadd.xlane.f32.xlu0 %v1343
        %v1345 = vpop.xlane.xlu0 %1344
        %v1346 = vsel %vm1096, %v1264, 0.0
        %1347 = vadd.xlane.f32.xlu0 %v1346
        %v1348 = vpop.xlane.xlu0 %1347
        %v1349 = vsel %vm1096, %v1266, 0.0
        %1350 = vadd.xlane.f32.xlu0 %v1349
        %v1351 = vpop.xlane.xlu0 %1350
        %v1352 = vsel %vm1096, %v1268, 0.0
        %1353 = vadd.xlane.f32.xlu0 %v1352
        %v1354 = vpop.xlane.xlu0 %1353
        %v1355 = vsel %vm1096, %v1270, 0.0
        %1356 = vadd.xlane.f32.xlu0 %v1355
        %v1357 = vpop.xlane.xlu0 %1356
        %v1358 = vsel %vm1096, %v1272, 0.0
        %1359 = vadd.xlane.f32.xlu0 %v1358
        %v1360 = vpop.xlane.xlu0 %1359
        %v1361 = vsel %vm1096, %v1274, 0.0
        %1362 = vadd.xlane.f32.xlu0 %v1361
        %v1363 = vpop.xlane.xlu0 %1362
        %v1364 = vsel %vm1096, %v1276, 0.0
        %1365 = vadd.xlane.f32.xlu0 %v1364
        %v1366 = vpop.xlane.xlu0 %1365
        %v1367 = vsel %vm1096, %v1278, 0.0
        %1368 = vadd.xlane.f32.xlu0 %v1367
        %v1369 = vpop.xlane.xlu0 %1368
        %v1370 = vsel %vm1096, %v1280, 0.0
        %1371 = vadd.xlane.f32.xlu0 %v1370
        %v1372 = vpop.xlane.xlu0 %1371
        %v1373 = vsel %vm1096, %v1282, 0.0
        %1374 = vadd.xlane.f32.xlu0 %v1373
        %v1375 = vpop.xlane.xlu0 %1374
        %v1376 = vsel %vm1096, %v1284, 0.0
        %1377 = vadd.xlane.f32.xlu0 %v1376
        %v1378 = vpop.xlane.xlu0 %1377
        %v1379 = vsel %vm1096, %v1286, 0.0
        %1380 = vadd.xlane.f32.xlu0 %v1379
        %v1381 = vpop.xlane.xlu0 %1380
        %v1382 = vsel %vm1096, %v1288, 0.0
        %1383 = vadd.xlane.f32.xlu0 %v1382
        %v1384 = vpop.xlane.xlu0 %1383
        %v1385 = vrcp.pop %v1291
        %v1386 = vrcp.pop %v1294
        %v1387 = vrcp.pop %v1297
        %v1388 = vrcp.pop %v1300
        %v1389 = vrcp.pop %v1303
        %v1390 = vrcp.pop %v1306
        %v1391 = vrcp.pop %v1309
        %v1392 = vrcp.pop %v1312
        %v1393 = vrcp.pop %v1315
        %v1394 = vrcp.pop %v1318
        %v1395 = vrcp.pop %v1321
        %v1396 = vrcp.pop %v1324
        %v1397 = vrcp.pop %v1327
        %v1398 = vrcp.pop %v1330
        %v1399 = vrcp.pop %v1333
        %v1400 = vrcp.pop %v1336
        %v1401 = vrcp.pop %v1339
        %v1402 = vrcp.pop %v1342
        %v1403 = vrcp.pop %v1345
        %v1404 = vrcp.pop %v1348
        %v1405 = vrcp.pop %v1351
        %v1406 = vrcp.pop %v1354
        %v1407 = vrcp.pop %v1357
        %v1408 = vrcp.pop %v1360
        %v1409 = vrcp.pop %v1363
        %v1410 = vrcp.pop %v1366
        %v1411 = vrcp.pop %v1369
        %v1412 = vrcp.pop %v1372
        %v1413 = vrcp.pop %v1375
        %v1414 = vrcp.pop %v1378
        %v1415 = vrcp.pop %v1381
        %v1416 = vrcp.pop %v1384
        %v1417 = vmul.f32 %v1226, %v1385
        %v1418 = vmul.f32 %v1228, %v1386
        %v1419 = vmul.f32 %v1230, %v1387
        %v1420 = vmul.f32 %v1232, %v1388
        %v1421 = vmul.f32 %v1234, %v1389
        %v1422 = vmul.f32 %v1236, %v1390
        %v1423 = vmul.f32 %v1238, %v1391
        %v1424 = vmul.f32 %v1240, %v1392
        %v1425 = vmul.f32 %v1242, %v1393
        %v1426 = vmul.f32 %v1244, %v1394
        %v1427 = vmul.f32 %v1246, %v1395
        %v1428 = vmul.f32 %v1248, %v1396
        %v1429 = vmul.f32 %v1250, %v1397
        %v1430 = vmul.f32 %v1252, %v1398
        %v1431 = vmul.f32 %v1254, %v1399
        %v1432 = vmul.f32 %v1256, %v1400
        %v1433 = vmul.f32 %v1258, %v1401
        %v1434 = vmul.f32 %v1260, %v1402
        %v1435 = vmul.f32 %v1262, %v1403
        %v1436 = vmul.f32 %v1264, %v1404
        %v1437 = vmul.f32 %v1266, %v1405
        %v1438 = vmul.f32 %v1268, %v1406
        %v1439 = vmul.f32 %v1270, %v1407
        %v1440 = vmul.f32 %v1272, %v1408
        %v1441 = vmul.f32 %v1274, %v1409
        %v1442 = vmul.f32 %v1276, %v1410
        %v1443 = vmul.f32 %v1278, %v1411
        %v1444 = vmul.f32 %v1280, %v1412
        %v1445 = vmul.f32 %v1282, %v1413
        %v1446 = vmul.f32 %v1284, %v1414
        %v1447 = vmul.f32 %v1286, %v1415
        %v1448 = vmul.f32 %v1288, %v1416
        %v1449 = vpack.c.bf16 %v1418, %v1417
        %v1450 = vpack.c.bf16 %v1420, %v1419
        %v1451 = vpack.c.bf16 %v1422, %v1421
        %v1452 = vpack.c.bf16 %v1424, %v1423
        %v1453 = vpack.c.bf16 %v1426, %v1425
        %v1454 = vpack.c.bf16 %v1428, %v1427
        %v1455 = vpack.c.bf16 %v1430, %v1429
        %v1456 = vpack.c.bf16 %v1432, %v1431
        %v1457 = vpack.c.bf16 %v1434, %v1433
        %v1458 = vpack.c.bf16 %v1436, %v1435
        %v1459 = vpack.c.bf16 %v1438, %v1437
        %v1460 = vpack.c.bf16 %v1440, %v1439
        %v1461 = vpack.c.bf16 %v1442, %v1441
        %v1462 = vpack.c.bf16 %v1444, %v1443
        %v1463 = vpack.c.bf16 %v1446, %v1445
        %v1464 = vpack.c.bf16 %v1448, %v1447
        %1469 = vrot.lane.b32.xlu0 %v612, 64
        %v1470 = vpop.permute.xlu0 %1469
        %1471 = vrot.lane.b32.xlu0 %v613, 64
        %v1472 = vpop.permute.xlu0 %1471
        %1473 = vrot.lane.b32.xlu0 %v614, 64
        %v1474 = vpop.permute.xlu0 %1473
        %1475 = vrot.lane.b32.xlu0 %v615, 64
        %v1476 = vpop.permute.xlu0 %1475
        %v1482 = vsel %vm1096, %v1449, 0
        %v1485 = vsel %vm1096, %v1450, 0
        %v1488 = vsel %vm1096, %v1451, 0
        %v1491 = vsel %vm1096, %v1452, 0
        %1493 = vmatprep.subr.bf16.mxu0 0
        %1494 = vmatpush1.bf16.msra.mxu0 %v1470
        %1495 = vmatprep.subr.bf16.mxu0 0
        %1496 = vmatpush1.bf16.msra.mxu0 %v1472
        %1497 = vmatprep.subr.bf16.mxu0 0
        %1498 = vmatpush1.bf16.msra.mxu0 %v1474
        %1499 = vmatprep.subr.bf16.mxu0 0
        %1500 = vmatpush1.bf16.msra.mxu0 %v1476
        %1501 = vmatprep.subr.bf16.mxu0 0
        %1502 = vmatpush1.bf16.msra.mxu0 0
        %1503 = vmatprep.subr.bf16.mxu0 0
        %1504 = vmatpush1.bf16.msra.mxu0 0
        %1505 = vmatprep.subr.bf16.mxu0 0
        %1506 = vmatpush1.bf16.msra.mxu0 0
        %1507 = vmatprep.subr.bf16.mxu0 0
        %1508 = vmatpush1.bf16.msra.mxu0 0
        %1509 = vmatprep.subr.bf16.mxu0 0
        %1510 = vmatpush1.bf16.msra.mxu0 0
        %1511 = vmatprep.subr.bf16.mxu0 0
        %1512 = vmatpush1.bf16.msra.mxu0 0
        %1513 = vmatprep.subr.bf16.mxu0 0
        %1514 = vmatpush1.bf16.msra.mxu0 0
        %1515 = vmatprep.subr.bf16.mxu0 0
        %1516 = vmatpush1.bf16.msra.mxu0 0
        %1517 = vmatprep.subr.bf16.mxu0 0
        %1518 = vmatpush1.bf16.msra.mxu0 0
        %1519 = vmatprep.subr.bf16.mxu0 0
        %1520 = vmatpush1.bf16.msra.mxu0 0
        %1521 = vmatprep.subr.bf16.mxu0 0
        %1522 = vmatpush1.bf16.msra.mxu0 0
        %1523 = vmatprep.subr.bf16.mxu0 0
        %1524 = vmatpush1.bf16.msra.mxu0 0
        %1525 = vmatprep.mubr.bf16.mxu0 0
        %1526 = vmatmul.mubr.bf16.gmra.mrb[0].mxu0 %v1482
        %v1527 = vpop.f32.mrb[0].mxu0
        %v1528 = vadd.f32 0.0, %v1527
        %v1529 = vpop.f32.mrb[0].mxu0
        %v1530 = vpop.f32.mrb[0].mxu0
        %v1531 = vadd.f32 0.0, %v1530
        %v1532 = vpop.f32.mrb[0].mxu0
        %1533 = vmatprep.mubr.bf16.mxu0 0
        %1534 = vmatmul.mubr.bf16.gmra.mrb[0].mxu0 %v1485
        %v1535 = vpop.f32.mrb[0].mxu0
        %v1536 = vadd.f32 0.0, %v1535
        %v1537 = vpop.f32.mrb[0].mxu0
        %v1538 = vpop.f32.mrb[0].mxu0
        %v1539 = vadd.f32 0.0, %v1538
        %v1540 = vpop.f32.mrb[0].mxu0
        %1541 = vmatprep.mubr.bf16.mxu0 0
        %1542 = vmatmul.mubr.bf16.gmra.mrb[0].mxu0 %v1488
        %v1543 = vpop.f32.mrb[0].mxu0
        %v1544 = vadd.f32 0.0, %v1543
        %v1545 = vpop.f32.mrb[0].mxu0
        %v1546 = vpop.f32.mrb[0].mxu0
        %v1547 = vadd.f32 0.0, %v1546
        %v1548 = vpop.f32.mrb[0].mxu0
        %1549 = vmatprep.mubr.bf16.mxu0 0
        %1550 = vmatmul.mubr.bf16.gmra.mrb[0].mxu0 %v1491
        %v1551 = vpop.f32.mrb[0].mxu0
        %v1552 = vadd.f32 0.0, %v1551
        %v1553 = vpop.f32.mrb[0].mxu0
        %v1554 = vpop.f32.mrb[0].mxu0
        %v1555 = vadd.f32 0.0, %v1554
        %v1556 = vpop.f32.mrb[0].mxu0
        %1557 = vdwg.mxu0
        %1562 = vrot.lane.b32.xlu0 %v616, 64
        %v1563 = vpop.permute.xlu0 %1562
        %1564 = vrot.lane.b32.xlu0 %v617, 64
        %v1565 = vpop.permute.xlu0 %1564
        %1566 = vrot.lane.b32.xlu0 %v618, 64
        %v1567 = vpop.permute.xlu0 %1566
        %1568 = vrot.lane.b32.xlu0 %v619, 64
        %v1569 = vpop.permute.xlu0 %1568
        %v1575 = vsel %vm1096, %v1453, 0
        %v1578 = vsel %vm1096, %v1454, 0
        %v1581 = vsel %vm1096, %v1455, 0
        %v1584 = vsel %vm1096, %v1456, 0
        %1586 = vmatprep.subr.bf16.mxu0 0
        %1587 = vmatpush1.bf16.msra.mxu0 %v1563
        %1588 = vmatprep.subr.bf16.mxu0 0
        %1589 = vmatpush1.bf16.msra.mxu0 %v1565
        %1590 = vmatprep.subr.bf16.mxu0 0
        %1591 = vmatpush1.bf16.msra.mxu0 %v1567
        %1592 = vmatprep.subr.bf16.mxu0 0
        %1593 = vmatpush1.bf16.msra.mxu0 %v1569
        %1594 = vmatprep.subr.bf16.mxu0 0
        %1595 = vmatpush1.bf16.msra.mxu0 0
        %1596 = vmatprep.subr.bf16.mxu0 0
        %1597 = vmatpush1.bf16.msra.mxu0 0
        %1598 = vmatprep.subr.bf16.mxu0 0
        %1599 = vmatpush1.bf16.msra.mxu0 0
        %1600 = vmatprep.subr.bf16.mxu0 0
        %1601 = vmatpush1.bf16.msra.mxu0 0
        %1602 = vmatprep.subr.bf16.mxu0 0
        %1603 = vmatpush1.bf16.msra.mxu0 0
        %1604 = vmatprep.subr.bf16.mxu0 0
        %1605 = vmatpush1.bf16.msra.mxu0 0
        %1606 = vmatprep.subr.bf16.mxu0 0
        %1607 = vmatpush1.bf16.msra.mxu0 0
        %1608 = vmatprep.subr.bf16.mxu0 0
        %1609 = vmatpush1.bf16.msra.mxu0 0
        %1610 = vmatprep.subr.bf16.mxu0 0
        %1611 = vmatpush1.bf16.msra.mxu0 0
        %1612 = vmatprep.subr.bf16.mxu0 0
        %1613 = vmatpush1.bf16.msra.mxu0 0
        %1614 = vmatprep.subr.bf16.mxu0 0
        %1615 = vmatpush1.bf16.msra.mxu0 0
        %1616 = vmatprep.subr.bf16.mxu0 0
        %1617 = vmatpush1.bf16.msra.mxu0 0
        %1618 = vmatprep.mubr.bf16.mxu0 0
        %1619 = vmatmul.mubr.bf16.gmra.mrb[0].mxu0 %v1575
        %v1620 = vpop.f32.mrb[0].mxu0
        %v1621 = vadd.f32 0.0, %v1620
        %v1622 = vpop.f32.mrb[0].mxu0
        %v1623 = vpop.f32.mrb[0].mxu0
        %v1624 = vadd.f32 0.0, %v1623
        %v1625 = vpop.f32.mrb[0].mxu0
        %1626 = vmatprep.mubr.bf16.mxu0 0
        %1627 = vmatmul.mubr.bf16.gmra.mrb[0].mxu0 %v1578
        %v1628 = vpop.f32.mrb[0].mxu0
        %v1629 = vadd.f32 0.0, %v1628
        %v1630 = vpop.f32.mrb[0].mxu0
        %v1631 = vpop.f32.mrb[0].mxu0
        %v1632 = vadd.f32 0.0, %v1631
        %v1633 = vpop.f32.mrb[0].mxu0
        %1634 = vmatprep.mubr.bf16.mxu0 0
        %1635 = vmatmul.mubr.bf16.gmra.mrb[0].mxu0 %v1581
        %v1636 = vpop.f32.mrb[0].mxu0
        %v1637 = vadd.f32 0.0, %v1636
        %v1638 = vpop.f32.mrb[0].mxu0
        %v1639 = vpop.f32.mrb[0].mxu0
        %v1640 = vadd.f32 0.0, %v1639
        %v1641 = vpop.f32.mrb[0].mxu0
        %1642 = vmatprep.mubr.bf16.mxu0 0
        %1643 = vmatmul.mubr.bf16.gmra.mrb[0].mxu0 %v1584
        %v1644 = vpop.f32.mrb[0].mxu0
        %v1645 = vadd.f32 0.0, %v1644
        %v1646 = vpop.f32.mrb[0].mxu0
        %v1647 = vpop.f32.mrb[0].mxu0
        %v1648 = vadd.f32 0.0, %v1647
        %v1649 = vpop.f32.mrb[0].mxu0
        %1650 = vdwg.mxu0
        %1655 = vrot.lane.b32.xlu0 %v620, 64
        %v1656 = vpop.permute.xlu0 %1655
        %1657 = vrot.lane.b32.xlu0 %v621, 64
        %v1658 = vpop.permute.xlu0 %1657
        %1659 = vrot.lane.b32.xlu0 %v622, 64
        %v1660 = vpop.permute.xlu0 %1659
        %1661 = vrot.lane.b32.xlu0 %v623, 64
        %v1662 = vpop.permute.xlu0 %1661
        %v1668 = vsel %vm1096, %v1457, 0
        %v1671 = vsel %vm1096, %v1458, 0
        %v1674 = vsel %vm1096, %v1459, 0
        %v1677 = vsel %vm1096, %v1460, 0
        %1679 = vmatprep.subr.bf16.mxu0 0
        %1680 = vmatpush1.bf16.msra.mxu0 %v1656
        %1681 = vmatprep.subr.bf16.mxu0 0
        %1682 = vmatpush1.bf16.msra.mxu0 %v1658
        %1683 = vmatprep.subr.bf16.mxu0 0
        %1684 = vmatpush1.bf16.msra.mxu0 %v1660
        %1685 = vmatprep.subr.bf16.mxu0 0
        %1686 = vmatpush1.bf16.msra.mxu0 %v1662
        %1687 = vmatprep.subr.bf16.mxu0 0
        %1688 = vmatpush1.bf16.msra.mxu0 0
        %1689 = vmatprep.subr.bf16.mxu0 0
        %1690 = vmatpush1.bf16.msra.mxu0 0
        %1691 = vmatprep.subr.bf16.mxu0 0
        %1692 = vmatpush1.bf16.msra.mxu0 0
        %1693 = vmatprep.subr.bf16.mxu0 0
        %1694 = vmatpush1.bf16.msra.mxu0 0
        %1695 = vmatprep.subr.bf16.mxu0 0
        %1696 = vmatpush1.bf16.msra.mxu0 0
        %1697 = vmatprep.subr.bf16.mxu0 0
        %1698 = vmatpush1.bf16.msra.mxu0 0
        %1699 = vmatprep.subr.bf16.mxu0 0
        %1700 = vmatpush1.bf16.msra.mxu0 0
        %1701 = vmatprep.subr.bf16.mxu0 0
        %1702 = vmatpush1.bf16.msra.mxu0 0
        %1703 = vmatprep.subr.bf16.mxu0 0
        %1704 = vmatpush1.bf16.msra.mxu0 0
        %1705 = vmatprep.subr.bf16.mxu0 0
        %1706 = vmatpush1.bf16.msra.mxu0 0
        %1707 = vmatprep.subr.bf16.mxu0 0
        %1708 = vmatpush1.bf16.msra.mxu0 0
        %1709 = vmatprep.subr.bf16.mxu0 0
        %1710 = vmatpush1.bf16.msra.mxu0 0
        %1711 = vmatprep.mubr.bf16.mxu0 0
        %1712 = vmatmul.mubr.bf16.gmra.mrb[0].mxu0 %v1668
        %v1713 = vpop.f32.mrb[0].mxu0
        %v1714 = vadd.f32 0.0, %v1713
        %v1715 = vpop.f32.mrb[0].mxu0
        %v1716 = vpop.f32.mrb[0].mxu0
        %v1717 = vadd.f32 0.0, %v1716
        %v1718 = vpop.f32.mrb[0].mxu0
        %1719 = vmatprep.mubr.bf16.mxu0 0
        %1720 = vmatmul.mubr.bf16.gmra.mrb[0].mxu0 %v1671
        %v1721 = vpop.f32.mrb[0].mxu0
        %v1722 = vadd.f32 0.0, %v1721
        %v1723 = vpop.f32.mrb[0].mxu0
        %v1724 = vpop.f32.mrb[0].mxu0
        %v1725 = vadd.f32 0.0, %v1724
        %v1726 = vpop.f32.mrb[0].mxu0
        %1727 = vmatprep.mubr.bf16.mxu0 0
        %1728 = vmatmul.mubr.bf16.gmra.mrb[0].mxu0 %v1674
        %v1729 = vpop.f32.mrb[0].mxu0
        %v1730 = vadd.f32 0.0, %v1729
        %v1731 = vpop.f32.mrb[0].mxu0
        %v1732 = vpop.f32.mrb[0].mxu0
        %v1733 = vadd.f32 0.0, %v1732
        %v1734 = vpop.f32.mrb[0].mxu0
        %1735 = vmatprep.mubr.bf16.mxu0 0
        %1736 = vmatmul.mubr.bf16.gmra.mrb[0].mxu0 %v1677
        %v1737 = vpop.f32.mrb[0].mxu0
        %v1738 = vadd.f32 0.0, %v1737
        %v1739 = vpop.f32.mrb[0].mxu0
        %v1740 = vpop.f32.mrb[0].mxu0
        %v1741 = vadd.f32 0.0, %v1740
        %v1742 = vpop.f32.mrb[0].mxu0
        %1743 = vdwg.mxu0
        %1748 = vrot.lane.b32.xlu0 %v624, 64
        %v1749 = vpop.permute.xlu0 %1748
        %1750 = vrot.lane.b32.xlu0 %v625, 64
        %v1751 = vpop.permute.xlu0 %1750
        %1752 = vrot.lane.b32.xlu0 %v626, 64
        %v1753 = vpop.permute.xlu0 %1752
        %1754 = vrot.lane.b32.xlu0 %v627, 64
        %v1755 = vpop.permute.xlu0 %1754
        %v1761 = vsel %vm1096, %v1461, 0
        %v1764 = vsel %vm1096, %v1462, 0
        %v1767 = vsel %vm1096, %v1463, 0
        %v1770 = vsel %vm1096, %v1464, 0
        %1772 = vmatprep.subr.bf16.mxu0 0
        %1773 = vmatpush1.bf16.msra.mxu0 %v1749
        %1774 = vmatprep.subr.bf16.mxu0 0
        %1775 = vmatpush1.bf16.msra.mxu0 %v1751
        %1776 = vmatprep.subr.bf16.mxu0 0
        %1777 = vmatpush1.bf16.msra.mxu0 %v1753
        %1778 = vmatprep.subr.bf16.mxu0 0
        %1779 = vmatpush1.bf16.msra.mxu0 %v1755
        %1780 = vmatprep.subr.bf16.mxu0 0
        %1781 = vmatpush1.bf16.msra.mxu0 0
        %1782 = vmatprep.subr.bf16.mxu0 0
        %1783 = vmatpush1.bf16.msra.mxu0 0
        %1784 = vmatprep.subr.bf16.mxu0 0
        %1785 = vmatpush1.bf16.msra.mxu0 0
        %1786 = vmatprep.subr.bf16.mxu0 0
        %1787 = vmatpush1.bf16.msra.mxu0 0
        %1788 = vmatprep.subr.bf16.mxu0 0
        %1789 = vmatpush1.bf16.msra.mxu0 0
        %1790 = vmatprep.subr.bf16.mxu0 0
        %1791 = vmatpush1.bf16.msra.mxu0 0
        %1792 = vmatprep.subr.bf16.mxu0 0
        %1793 = vmatpush1.bf16.msra.mxu0 0
        %1794 = vmatprep.subr.bf16.mxu0 0
        %1795 = vmatpush1.bf16.msra.mxu0 0
        %1796 = vmatprep.subr.bf16.mxu0 0
        %1797 = vmatpush1.bf16.msra.mxu0 0
        %1798 = vmatprep.subr.bf16.mxu0 0
        %1799 = vmatpush1.bf16.msra.mxu0 0
        %1800 = vmatprep.subr.bf16.mxu0 0
        %1801 = vmatpush1.bf16.msra.mxu0 0
        %1802 = vmatprep.subr.bf16.mxu0 0
        %1803 = vmatpush1.bf16.msra.mxu0 0
        %1804 = vmatprep.mubr.bf16.mxu0 0
        %1805 = vmatmul.mubr.bf16.gmra.mrb[0].mxu0 %v1761
        %v1806 = vpop.f32.mrb[0].mxu0
        %v1807 = vadd.f32 0.0, %v1806
        %v1808 = vpop.f32.mrb[0].mxu0
        %v1809 = vpop.f32.mrb[0].mxu0
        %v1810 = vadd.f32 0.0, %v1809
        %v1811 = vpop.f32.mrb[0].mxu0
        %1812 = vmatprep.mubr.bf16.mxu0 0
        %1813 = vmatmul.mubr.bf16.gmra.mrb[0].mxu0 %v1764
        %v1814 = vpop.f32.mrb[0].mxu0
        %v1815 = vadd.f32 0.0, %v1814
        %v1816 = vpop.f32.mrb[0].mxu0
        %v1817 = vpop.f32.mrb[0].mxu0
        %v1818 = vadd.f32 0.0, %v1817
        %v1819 = vpop.f32.mrb[0].mxu0
        %1820 = vmatprep.mubr.bf16.mxu0 0
        %1821 = vmatmul.mubr.bf16.gmra.mrb[0].mxu0 %v1767
        %v1822 = vpop.f32.mrb[0].mxu0
        %v1823 = vadd.f32 0.0, %v1822
        %v1824 = vpop.f32.mrb[0].mxu0
        %v1825 = vpop.f32.mrb[0].mxu0
        %v1826 = vadd.f32 0.0, %v1825
        %v1827 = vpop.f32.mrb[0].mxu0
        %1828 = vmatprep.mubr.bf16.mxu0 0
        %1829 = vmatmul.mubr.bf16.gmra.mrb[0].mxu0 %v1770
        %v1830 = vpop.f32.mrb[0].mxu0
        %v1831 = vadd.f32 0.0, %v1830
        %v1832 = vpop.f32.mrb[0].mxu0
        %v1833 = vpop.f32.mrb[0].mxu0
        %v1834 = vadd.f32 0.0, %v1833
        %v1835 = vpop.f32.mrb[0].mxu0
        %1836 = vdwg.mxu0
        %v1837 = vsel %vm346, %v1528, 0.0
        %v1838 = vsel %vm346, %v1536, 0.0
        %v1839 = vadd.f32 %v1837, %v1838
        %v1840 = vsel %vm346, %v1544, 0.0
        %v1841 = vadd.f32 %v1839, %v1840
        %v1842 = vsel %vm346, %v1552, 0.0
        %v1843 = vadd.f32 %v1841, %v1842
        %v1844 = vsel %vm346, %v1531, 0.0
        %v1845 = vsel %vm346, %v1539, 0.0
        %v1846 = vadd.f32 %v1844, %v1845
        %v1847 = vsel %vm346, %v1547, 0.0
        %v1848 = vadd.f32 %v1846, %v1847
        %v1849 = vsel %vm346, %v1555, 0.0
        %v1850 = vadd.f32 %v1848, %v1849
        %v1851 = vsel %vm346, %v1621, 0.0
        %v1852 = vsel %vm346, %v1629, 0.0
        %v1853 = vadd.f32 %v1851, %v1852
        %v1854 = vsel %vm346, %v1637, 0.0
        %v1855 = vadd.f32 %v1853, %v1854
        %v1856 = vsel %vm346, %v1645, 0.0
        %v1857 = vadd.f32 %v1855, %v1856
        %v1858 = vsel %vm346, %v1624, 0.0
        %v1859 = vsel %vm346, %v1632, 0.0
        %v1860 = vadd.f32 %v1858, %v1859
        %v1861 = vsel %vm346, %v1640, 0.0
        %v1862 = vadd.f32 %v1860, %v1861
        %v1863 = vsel %vm346, %v1648, 0.0
        %v1864 = vadd.f32 %v1862, %v1863
        %v1865 = vsel %vm346, %v1714, 0.0
        %v1866 = vsel %vm346, %v1722, 0.0
        %v1867 = vadd.f32 %v1865, %v1866
        %v1868 = vsel %vm346, %v1730, 0.0
        %v1869 = vadd.f32 %v1867, %v1868
        %v1870 = vsel %vm346, %v1738, 0.0
        %v1871 = vadd.f32 %v1869, %v1870
        %v1872 = vsel %vm346, %v1717, 0.0
        %v1873 = vsel %vm346, %v1725, 0.0
        %v1874 = vadd.f32 %v1872, %v1873
        %v1875 = vsel %vm346, %v1733, 0.0
        %v1876 = vadd.f32 %v1874, %v1875
        %v1877 = vsel %vm346, %v1741, 0.0
        %v1878 = vadd.f32 %v1876, %v1877
        %v1879 = vsel %vm346, %v1807, 0.0
        %v1880 = vsel %vm346, %v1815, 0.0
        %v1881 = vadd.f32 %v1879, %v1880
        %v1882 = vsel %vm346, %v1823, 0.0
        %v1883 = vadd.f32 %v1881, %v1882
        %v1884 = vsel %vm346, %v1831, 0.0
        %v1885 = vadd.f32 %v1883, %v1884
        %v1886 = vsel %vm346, %v1810, 0.0
        %v1887 = vsel %vm346, %v1818, 0.0
        %v1888 = vadd.f32 %v1886, %v1887
        %v1889 = vsel %vm346, %v1826, 0.0
        %v1890 = vadd.f32 %v1888, %v1889
        %v1891 = vsel %vm346, %v1834, 0.0
        %v1892 = vadd.f32 %v1890, %v1891
        %v1893 = vpack.c.bf16 %v1850, %v1843
        %v1894 = vpack.c.bf16 %v1864, %v1857
        %v1895 = vpack.c.bf16 %v1878, %v1871
        %v1896 = vpack.c.bf16 %v1892, %v1885
        %v1897 = vld [vmem:[#allocation8] sm:$0xf]
        %v1898 = vld [vmem:[#allocation8 + $0x4] sm:$0xf]
        %v1899 = vld [vmem:[#allocation8 + $0x8] sm:$0xf]
        %v1900 = vld [vmem:[#allocation8 + $0xc] sm:$0xf]
        %v1901 = vld [vmem:[%s5] sm:$0x1]
        %v1903 = vlaneseq
        %v1904 = vshrl.u32 %v1903, 7
        %v1905 = vsub.s32 0, %v1904
        %v1906 = vrot.slane %v1901, %v1905
        %v1912 = vunpack.c.l.b16 %v1897
        %v1913 = vunpack.c.l.b16 %v1898
        %v1914 = vunpack.c.l.b16 %v1899
        %v1915 = vunpack.c.l.b16 %v1900
        %v1916 = vpack.c.b16 %v1913, %v1912
        %v1917 = vpack.c.b16 %v1915, %v1914
        %v1921 = vsel %vm346, %v1893, 0
        %v1924 = vsel %vm346, %v1894, 0
        %v1927 = vsel %vm346, %v1895, 0
        %v1930 = vsel %vm346, %v1896, 0
        %1932 = vmatprep.subr.bf16.mxu0 0
        %1933 = vmatpush1.bf16.msra.mxu0 %v1916
        %1934 = vmatprep.subr.bf16.mxu0 0
        %1935 = vmatpush1.bf16.msra.mxu0 %v1917
        %1936 = vmatprep.subr.bf16.mxu0 0
        %1937 = vmatpush1.bf16.msra.mxu0 0
        %1938 = vmatprep.subr.bf16.mxu0 0
        %1939 = vmatpush1.bf16.msra.mxu0 0
        %1940 = vmatprep.subr.bf16.mxu0 0
        %1941 = vmatpush1.bf16.msra.mxu0 0
        %1942 = vmatprep.subr.bf16.mxu0 0
        %1943 = vmatpush1.bf16.msra.mxu0 0
        %1944 = vmatprep.subr.bf16.mxu0 0
        %1945 = vmatpush1.bf16.msra.mxu0 0
        %1946 = vmatprep.subr.bf16.mxu0 0
        %1947 = vmatpush1.bf16.msra.mxu0 0
        %1948 = vmatprep.subr.bf16.mxu0 0
        %1949 = vmatpush1.bf16.msra.mxu0 0
        %1950 = vmatprep.subr.bf16.mxu0 0
        %1951 = vmatpush1.bf16.msra.mxu0 0
        %1952 = vmatprep.subr.bf16.mxu0 0
        %1953 = vmatpush1.bf16.msra.mxu0 0
        %1954 = vmatprep.subr.bf16.mxu0 0
        %1955 = vmatpush1.bf16.msra.mxu0 0
        %1956 = vmatprep.subr.bf16.mxu0 0
        %1957 = vmatpush1.bf16.msra.mxu0 0
        %1958 = vmatprep.subr.bf16.mxu0 0
        %1959 = vmatpush1.bf16.msra.mxu0 0
        %1960 = vmatprep.subr.bf16.mxu0 0
        %1961 = vmatpush1.bf16.msra.mxu0 0
        %1962 = vmatprep.subr.bf16.mxu0 0
        %1963 = vmatpush1.bf16.msra.mxu0 0
        %1964 = vmatprep.mubr.bf16.mxu0 0
        %1965 = vmatmul.mubr.bf16.gmra.mrb[0].mxu0 %v1921
        %v1966 = vpop.f32.mrb[0].mxu0
        %v1967 = vadd.f32 %v1906, %v1966
        %v1968 = vpop.f32.mrb[0].mxu0
        %v1969 = vpop.f32.mrb[0].mxu0
        %v1970 = vadd.f32 %v1906, %v1969
        %v1971 = vpop.f32.mrb[0].mxu0
        %1972 = vmatprep.mubr.bf16.mxu0 0
        %1973 = vmatmul.mubr.bf16.gmra.mrb[0].mxu0 %v1924
        %v1974 = vpop.f32.mrb[0].mxu0
        %v1975 = vadd.f32 %v1906, %v1974
        %v1976 = vpop.f32.mrb[0].mxu0
        %v1977 = vpop.f32.mrb[0].mxu0
        %v1978 = vadd.f32 %v1906, %v1977
        %v1979 = vpop.f32.mrb[0].mxu0
        %1980 = vmatprep.mubr.bf16.mxu0 0
        %1981 = vmatmul.mubr.bf16.gmra.mrb[0].mxu0 %v1927
        %v1982 = vpop.f32.mrb[0].mxu0
        %v1983 = vadd.f32 %v1906, %v1982
        %v1984 = vpop.f32.mrb[0].mxu0
        %v1985 = vpop.f32.mrb[0].mxu0
        %v1986 = vadd.f32 %v1906, %v1985
        %v1987 = vpop.f32.mrb[0].mxu0
        %1988 = vmatprep.mubr.bf16.mxu0 0
        %1989 = vmatmul.mubr.bf16.gmra.mrb[0].mxu0 %v1930
        %v1990 = vpop.f32.mrb[0].mxu0
        %v1991 = vadd.f32 %v1906, %v1990
        %v1992 = vpop.f32.mrb[0].mxu0
        %v1993 = vpop.f32.mrb[0].mxu0
        %v1994 = vadd.f32 %v1906, %v1993
        %v1995 = vpop.f32.mrb[0].mxu0
        %1996 = vdwg.mxu0
        %1997 = vst.msk [vmem:[%s314] sm:$0xff] %vm346, %v1967
        %1998 = vst.msk [vmem:[%s314 + $0x8] sm:$0xff] %vm346, %v1970
        %1999 = vst.msk [vmem:[%s314 + $0x10] sm:$0xff] %vm346, %v1975
        %2000 = vst.msk [vmem:[%s314 + $0x18] sm:$0xff] %vm346, %v1978
        %2001 = vst.msk [vmem:[%s314 + $0x20] sm:$0xff] %vm346, %v1983
        %2002 = vst.msk [vmem:[%s314 + $0x28] sm:$0xff] %vm346, %v1986
        %2003 = vst.msk [vmem:[%s314 + $0x30] sm:$0xff] %vm346, %v1991
        %2004 = vst.msk [vmem:[%s314 + $0x38] sm:$0xff] %vm346, %v1994
        %s2005 = sand.u32 %s164, 1
        %s2006 = scalar_lea.sflag [#allocation4], %s2005
        %s2007 = sand.u32 %s164, 1
        %s2008 = smul.addr %s2007, 64
        %s2009 = scalar_lea.vmem [#allocation10], %s2008
        // Predicated region
        $region61: #{tpu_custom_call.1} parent=43 // pred_check
          %p2010 = pneg %p174
        $region62: #{tpu_custom_call.1} parent=43 // pred_check_branch
          %2012 = sbr.rel (%p2010) target = $region64
        $region63: #{tpu_custom_call.1} parent=43 // pred_region
          %s2013 = smul.u32 4, %s25
          %s2015 = ssub.s32 1024, 1024
          %2016 = vsyncadd %s2006, %s2015
          %s2017 = smul.addr %s2013, 2
          %s2018 = smul.addr %s2017, 128
          %s2019 = scalar_lea.hbm %s6, %s2018
          %s2020 = sshll.u32 %s2009, 4
          %s2021 = int_to_ptr.vmem [resolvable:$true] %s2020
          %2026 = dma.vmem_to_hbm [thread:$0]  %s2021, 1024, %s2019, %s2006, 128, 128, 8
        $region64: #{tpu_custom_call.1} parent=43 // pred_fallthru
          _
      $region44: #{tpu_custom_call.1} parent=5 // pred_fallthru
        _
      %p2027 = scmp.le.s32.totalorder 2, %s20
      // Predicated region
      $region65: #{tpu_custom_call.1} parent=5 // pred_check
        %p2028 = pneg %p2027
      $region66: #{tpu_custom_call.1} parent=5 // pred_check_branch
        %2030 = sbr.rel (%p2028) target = $region68
      $region67: #{tpu_custom_call.1} parent=5 // pred_region
        %s2031 = ssub.s32 %s20, 2
        // Predicated region
        $region69: #{tpu_custom_call.1} parent=67 // pred_check
          %p2032 = pneg %p180
        $region70: #{tpu_custom_call.1} parent=67 // pred_check_branch
          %2034 = sbr.rel (%p2032) target = $region72
        $region71: #{tpu_custom_call.1} parent=67 // pred_region
          %s2035 = sand.u32 %s165, 1
          %s2036 = scalar_lea.sflag [#allocation4], %s2035
          %s2037 = sand.u32 %s165, 1
          %s2038 = smul.addr %s2037, 64
          %s2039 = scalar_lea.vmem [#allocation10], %s2038
          %2040 = dma.done %s2036, 1024
        $region72: #{tpu_custom_call.1} parent=67 // pred_fallthru
          _
      $region68: #{tpu_custom_call.1} parent=5 // pred_fallthru
        _
    $region6: #{tpu_custom_call.1} parent=1 // loop_footer
      %s24 = sadd.s32 1, %s20
    $region7: #{tpu_custom_call.1} parent=1 // loop_footer_branch
      %19 = sbr.rel target = $region3
    $region8: #{tpu_custom_call.1} parent=1 // loop_exit
      _
    %2041 = vsyncpa [#allocation3], 1
    %s2042 = scalar_lea.sflag [#allocation3], 1
    %2043 = vsyncpa %s2042, 1
    %2044 = vsyncpa [#allocation6], 1
    %2045 = vsyncpa [#allocation9], 1
    %2046 = vsyncpa [#allocation4], 1
    %s2047 = scalar_lea.sflag [#allocation4], 1
    %2048 = vsyncpa %s2047, 1

</llo_original>
